<compile_context>
chip_gen: v5e
topology: v5e:2x2
jax: 0.10.0
libtpu: 0.0.40
codegen_flags: <defaults>
</compile_context>

<pallas_src>
import math
import jax
import jax.numpy as jnp
from jax.experimental import pallas as pl
from jax.experimental.pallas import tpu as pltpu

# ----------------------------- hyper-parameters ------------------------------
B_SEQ = 2                          # number of sequences (batch)
T_SEQ = 4                          # frames per sequence
IN_C, IN_H, IN_W = 3, 16, 16       # input_shape (C, H, W)
REDUCTION = 4                      # synthetic backbone reduction_factor
BB_OUT_C = 8                       # synthetic backbone out_channels[-1]
POOL_CHANNELS = 4
ANCHORS = 8

LSTM_IN = 65                       # CNN_LSTM_lstm_input_size
LSTM_H = 65                        # CNN_LSTM_lstm_hidden_size
G4 = 4 * LSTM_H                    # natural gate width (i, f, g, o) = 260

H_PAD = 128                        # lane-aligned hidden width (padded from 65)
G4P = 4 * H_PAD                    # padded gate width = 512, gate order [i,f,o,g]

HF = math.ceil(IN_H / REDUCTION)   # 4
WF = math.ceil(IN_W / REDUCTION)   # 4
HW = HF * WF                       # 16 spatial positions per frame
NUM_CH = POOL_CHANNELS * HF * WF   # 64  (num_channels)
FC1 = NUM_CH // 2                  # 32
FC2 = NUM_CH // 4                  # 16
A21 = ANCHORS * 2 + 1              # 17  (anchors*2+1)

N_FRAMES = B_SEQ * T_SEQ           # 8
N_ROWS = N_FRAMES * HW             # 128 pixel rows fed to the backbone


# --------------------------------- kernel ------------------------------------
def fused_forward_kernel(
    xs_ref,                                   # (T*B*HW, IN_C)  t-major frame rows
    wbb_ref, bbb_ref,                         # synthetic backbone 1x1 conv
    wconv_ref, bconv_ref,                     # self.conv 1x1
    w1_ref, b1_ref, w2_ref, b2_ref, w3_ref, b3_ref,   # self.fc (3 Linear + ReLU)
    wih0_ref, whh0_ref, bl0_ref,              # LSTM layer 0 (padded / [i,f,o,g])
    wl1_ref, bl1_ref,                         # LSTM layer 1 (fused [wih1;whh1])
    scale_ref, offset_ref,                    # self.scale / self.offset (padded)
    wo_ref, bo_ref,                           # self.fc_out Linear (padded rows)
    out_ref,                                  # (B, A21)
):
    f32 = jnp.float32
    xs = xs_ref[...]                                                     # (128, 3)

    # --- synthetic backbone 1x1 conv + ReLU: one MXU push, M = 128 rows -------
    h0 = jnp.maximum(
        jnp.dot(xs, wbb_ref[...], preferred_element_type=f32) + bbb_ref[...], 0.0)

    # --- self.conv: 1x1 conv == per-pixel linear (MXU) ------------------------
    h1 = jnp.dot(h0, wconv_ref[...], preferred_element_type=f32) + bconv_ref[...]

    # --- AdaptiveMaxPool2d((1,1)) + flatten: sublane reduce per frame ---------
    fea_back = jnp.max(h1.reshape(N_FRAMES, HW, NUM_CH), axis=1)         # (T*B, 64)

    # --- self.fc: Linear -> ReLU (x3) -----------------------------------------
    g = jnp.maximum(jnp.dot(fea_back, w1_ref[...], preferred_element_type=f32) + b1_ref[...], 0.0)
    g = jnp.maximum(jnp.dot(g, w2_ref[...], preferred_element_type=f32) + b2_ref[...], 0.0)
    fea = jnp.maximum(jnp.dot(g, w3_ref[...], preferred_element_type=f32) + b3_ref[...], 0.0)  # (T*B, 65)

    # --- layer-0 input->gate matmul batched over all (t, b) rows --------------
    xg0 = jnp.dot(fea, wih0_ref[...], preferred_element_type=f32) + bl0_ref[...]   # (T*B, 512)

    whh0 = whh0_ref[...]          # (H_PAD, G4P)
    wl1 = wl1_ref[...]            # (2*H_PAD, G4P)  = [wih1 ; whh1] fused
    bl1 = bl1_ref[...]            # (1, G4P)

    def cell(gates, c):
        # gate order [i, f, o, g]; sigmoid over 3 vreg blocks, tanh over 1.
        sg = jax.nn.sigmoid(gates[:, 0:3 * H_PAD])
        gg = jnp.tanh(gates[:, 3 * H_PAD:4 * H_PAD])
        i = sg[:, 0:H_PAD]
        f = sg[:, H_PAD:2 * H_PAD]
        o = sg[:, 2 * H_PAD:3 * H_PAD]
        c_new = f * c + i * gg
        h_new = o * jnp.tanh(c_new)
        return h_new, c_new

    # --- 2-layer LSTM, all B sequences as matmul rows, fully unrolled over T --
    zero = jnp.zeros((B_SEQ, H_PAD), f32)
    h0s = c0s = h1s = c1s = zero
    for t in range(T_SEQ):
        g0 = xg0[t * B_SEQ:(t + 1) * B_SEQ, :] + jnp.dot(
            h0s, whh0, preferred_element_type=f32)
        h0s, c0s = cell(g0, c0s)
        g1 = jnp.dot(jnp.concatenate([h0s, h1s], axis=-1), wl1,
                     preferred_element_type=f32) + bl1
        h1s, c1s = cell(g1, c1s)

    # --- scale/offset + last-frame select + fc_out (ReLU -> Linear) -----------
    # (elementwise scale/offset commutes with the [:, -1, :] selection; padded
    #  lanes of h1s/scale/offset/wo are exactly zero so they contribute nothing)
    y = h1s * scale_ref[...] + offset_ref[...]                           # (B, H_PAD)
    r = jnp.maximum(y, 0.0)
    out_ref[...] = jnp.dot(r, wo_ref[...], preferred_element_type=f32) + bo_ref[...]


# ------------------------------- parameters -----------------------------------
def init_params(key):
    ks = jax.random.split(key, 24)
    n = lambda i, shape, s=0.1: (s * jax.random.normal(ks[i], shape)).astype(jnp.float32)
    return {
        "wbb": n(0, (IN_C, BB_OUT_C)),        "bbb": n(1, (1, BB_OUT_C)),
        "wconv": n(2, (BB_OUT_C, NUM_CH)),    "bconv": n(3, (1, NUM_CH)),
        "w1": n(4, (NUM_CH, FC1)),            "b1": n(5, (1, FC1)),
        "w2": n(6, (FC1, FC2)),               "b2": n(7, (1, FC2)),
        "w3": n(8, (FC2, LSTM_IN)),           "b3": n(9, (1, LSTM_IN)),
        "wih0": n(10, (LSTM_IN, G4), 0.2),    "whh0": n(11, (LSTM_H, G4), 0.2),
        "bl0": n(12, (1, G4), 0.2) + n(13, (1, G4), 0.2),   # b_ih + b_hh folded
        "wih1": n(14, (LSTM_H, G4), 0.2),     "whh1": n(15, (LSTM_H, G4), 0.2),
        "bl1": n(16, (1, G4), 0.2) + n(17, (1, G4), 0.2),
        "scale": 0.5 * jnp.ones((1, LSTM_H), jnp.float32),   # module init: 1/2 * ones
        "offset": 0.5 * jnp.ones((1, LSTM_H), jnp.float32),  # module init: 0.5 * ones
        "wo": n(18, (LSTM_H, A21)),           "bo": n(19, (1, A21)),
    }


# Weight prep: permute gate columns [i,f,g,o] -> [i,f,o,g], zero-pad each gate
# block 65 -> 128 lanes, zero-pad recurrent K dims 65 -> 128, and fuse layer-1
# input/recurrent weights into a single stacked matrix.
def _pad_gate_cols(w):                       # (K, 4*LSTM_H) cols [i,f,g,o]
    i = w[:, 0 * LSTM_H:1 * LSTM_H]
    f = w[:, 1 * LSTM_H:2 * LSTM_H]
    g = w[:, 2 * LSTM_H:3 * LSTM_H]
    o = w[:, 3 * LSTM_H:4 * LSTM_H]
    pad = lambda a: jnp.pad(a, ((0, 0), (0, H_PAD - LSTM_H)))
    return jnp.concatenate([pad(i), pad(f), pad(o), pad(g)], axis=1)     # (K, G4P)


def _pad_rows(w):                            # pad K: LSTM_H -> H_PAD with zeros
    return jnp.pad(w, ((0, H_PAD - LSTM_H), (0, 0)))


def prepare_params(p):
    padw = lambda a: jnp.pad(a, ((0, 0), (0, H_PAD - LSTM_H)))
    return {
        "wbb": p["wbb"], "bbb": p["bbb"], "wconv": p["wconv"], "bconv": p["bconv"],
        "w1": p["w1"], "b1": p["b1"], "w2": p["w2"], "b2": p["b2"],
        "w3": p["w3"], "b3": p["b3"],
        "wih0": _pad_gate_cols(p["wih0"]),                     # (65, 512)
        "whh0": _pad_rows(_pad_gate_cols(p["whh0"])),          # (128, 512)
        "bl0": _pad_gate_cols(p["bl0"]),                       # (1, 512)
        "wl1": jnp.concatenate([_pad_rows(_pad_gate_cols(p["wih1"])),
                                _pad_rows(_pad_gate_cols(p["whh1"]))], axis=0),  # (256, 512)
        "bl1": _pad_gate_cols(p["bl1"]),                       # (1, 512)
        "scale": padw(p["scale"]),                             # (1, 128)
        "offset": padw(p["offset"]),                           # (1, 128)
        "wo": _pad_rows(p["wo"]),                              # (128, 17)
        "bo": p["bo"],
    }


KERNEL_PARAM_ORDER = ["wbb", "bbb", "wconv", "bconv",
                      "w1", "b1", "w2", "b2", "w3", "b3",
                      "wih0", "whh0", "bl0", "wl1", "bl1",
                      "scale", "offset", "wo", "bo"]


# ------------------------------- wrapper ---------------------------------------
def preprocess(x):
    # x: (B, T, C, H, W) -> stride-R subsample (synthetic backbone), t-major
    # channels-last rows so timestep t of all sequences is a contiguous row slice.
    xs = x[:, :, :, ::REDUCTION, ::REDUCTION]                   # (B, T, C, HF, WF)
    xs = jnp.transpose(xs, (1, 0, 3, 4, 2))                     # (T, B, HF, WF, C)
    return xs.reshape(T_SEQ * B_SEQ * HW, IN_C).astype(jnp.float32)


def _full_spec(shape):
    nd = len(shape)
    return pl.BlockSpec(shape, lambda i, _nd=nd: (0,) * _nd)


@jax.jit
def forward_pallas(x, params):
    p = prepare_params(params)                                  # tiny XLA-side prep
    xs = preprocess(x)                                          # (T*B*HW, IN_C)
    args = [xs] + [p[k] for k in KERNEL_PARAM_ORDER]

    in_specs = [_full_spec(a.shape) for a in args]

    out = pl.pallas_call(
        fused_forward_kernel,
        out_shape=jax.ShapeDtypeStruct((B_SEQ, A21), jnp.float32),
        grid=(1,),                     # batch folded into matmul M; one chain total
        in_specs=in_specs,
        out_specs=pl.BlockSpec((B_SEQ, A21), lambda i: (0, 0)),
        compiler_params=pltpu.CompilerParams(
            dimension_semantics=("arbitrary",)),
    )(*args)
    return out                                                  # (B, A21)


# ------------------------------ pure-JAX reference ------------------------------
def forward_reference(x, p):
    xf = x.reshape(B_SEQ * T_SEQ, IN_C, IN_H, IN_W)
    xs = xf[:, :, ::REDUCTION, ::REDUCTION]                     # (B*T, C, HF, WF)
    xs = jnp.transpose(xs, (0, 2, 3, 1)).reshape(B_SEQ * T_SEQ * HW, IN_C).astype(jnp.float32)

    h0 = jnp.maximum(xs @ p["wbb"] + p["bbb"], 0.0)
    h1 = h0 @ p["wconv"] + p["bconv"]
    fea_back = jnp.max(h1.reshape(B_SEQ * T_SEQ, HW, NUM_CH), axis=1)   # (B*T, NUM_CH)
    g = jnp.maximum(fea_back @ p["w1"] + p["b1"], 0.0)
    g = jnp.maximum(g @ p["w2"] + p["b2"], 0.0)
    fea = jnp.maximum(g @ p["w3"] + p["b3"], 0.0)                       # (B*T, LSTM_IN)
    fea = fea.reshape(B_SEQ, T_SEQ, LSTM_IN)

    def cell(gates, c):
        i = jax.nn.sigmoid(gates[:, 0:LSTM_H])
        f = jax.nn.sigmoid(gates[:, LSTM_H:2 * LSTM_H])
        gg = jnp.tanh(gates[:, 2 * LSTM_H:3 * LSTM_H])
        o = jax.nn.sigmoid(gates[:, 3 * LSTM_H:4 * LSTM_H])
        c = f * c + i * gg
        return o * jnp.tanh(c), c

    outs = []
    for b in range(B_SEQ):
        h0s = c0s = h1s = c1s = jnp.zeros((1, LSTM_H), jnp.float32)
        for t in range(T_SEQ):
            x_t = fea[b, t:t + 1, :]
            g0 = x_t @ p["wih0"] + h0s @ p["whh0"] + p["bl0"]
            h0s, c0s = cell(g0, c0s)
            g1 = h0s @ p["wih1"] + h1s @ p["whh1"] + p["bl1"]
            h1s, c1s = cell(g1, c1s)
        y = h1s * p["scale"] + p["offset"]                      # scale/offset then [-1]
        r = jnp.maximum(y, 0.0) @ p["wo"] + p["bo"]             # fc_out: ReLU -> Linear
        outs.append(r)
    return jnp.concatenate(outs, axis=0)                        # (B, A21)


if __name__ == "__main__":
    key = jax.random.PRNGKey(0)
    kx, kp = jax.random.split(key)
    x = jax.random.normal(kx, (B_SEQ, T_SEQ, IN_C, IN_H, IN_W), dtype=jnp.float32)
    params = init_params(kp)

    out = forward_pallas(x, params)
    out = jax.block_until_ready(out)

    ref = forward_reference(x, params)
    assert out.shape == (B_SEQ, A21), out.shape
    assert jnp.allclose(out, ref, atol=1e-2, rtol=1e-2), (out, ref)
    print("KERNEL_OK")
</pallas_src>

<mosaic_0001>
module attributes {stable_mosaic.version = 11 : i64} {
  func.func @fused_forward_kernel(%arg0: i32, %arg1: memref<128x3xf32, #tpu.memory_space<vmem>>, %arg2: memref<3x8xf32, #tpu.memory_space<vmem>>, %arg3: memref<1x8xf32, #tpu.memory_space<vmem>>, %arg4: memref<8x64xf32, #tpu.memory_space<vmem>>, %arg5: memref<1x64xf32, #tpu.memory_space<vmem>>, %arg6: memref<64x32xf32, #tpu.memory_space<vmem>>, %arg7: memref<1x32xf32, #tpu.memory_space<vmem>>, %arg8: memref<32x16xf32, #tpu.memory_space<vmem>>, %arg9: memref<1x16xf32, #tpu.memory_space<vmem>>, %arg10: memref<16x65xf32, #tpu.memory_space<vmem>>, %arg11: memref<1x65xf32, #tpu.memory_space<vmem>>, %arg12: memref<65x512xf32, #tpu.memory_space<vmem>>, %arg13: memref<128x512xf32, #tpu.memory_space<vmem>>, %arg14: memref<1x512xf32, #tpu.memory_space<vmem>>, %arg15: memref<256x512xf32, #tpu.memory_space<vmem>>, %arg16: memref<1x512xf32, #tpu.memory_space<vmem>>, %arg17: memref<1x128xf32, #tpu.memory_space<vmem>>, %arg18: memref<1x128xf32, #tpu.memory_space<vmem>>, %arg19: memref<128x17xf32, #tpu.memory_space<vmem>>, %arg20: memref<1x17xf32, #tpu.memory_space<vmem>>, %arg21: memref<2x17xf32, #tpu.memory_space<vmem>>) attributes {dimension_semantics = [#tpu.dimension_semantics<arbitrary>], iteration_bounds = array<i64: 1>, scalar_prefetch = 0 : i64, scratch_operands = 0 : i64, tpu.core_type = #tpu.core_type<tc>, window_params = [{pipeline_mode = #tpu.pipeline_mode<synchronous>, transform_indices = @transform_0, window_bounds = array<i64: 128, 3>}, {pipeline_mode = #tpu.pipeline_mode<synchronous>, transform_indices = @transform_1, window_bounds = array<i64: 3, 8>}, {pipeline_mode = #tpu.pipeline_mode<synchronous>, transform_indices = @transform_2, window_bounds = array<i64: 1, 8>}, {pipeline_mode = #tpu.pipeline_mode<synchronous>, transform_indices = @transform_3, window_bounds = array<i64: 8, 64>}, {pipeline_mode = #tpu.pipeline_mode<synchronous>, transform_indices = @transform_4, window_bounds = array<i64: 1, 64>}, {pipeline_mode = #tpu.pipeline_mode<synchronous>, transform_indices = @transform_5, window_bounds = array<i64: 64, 32>}, {pipeline_mode = #tpu.pipeline_mode<synchronous>, transform_indices = @transform_6, window_bounds = array<i64: 1, 32>}, {pipeline_mode = #tpu.pipeline_mode<synchronous>, transform_indices = @transform_7, window_bounds = array<i64: 32, 16>}, {pipeline_mode = #tpu.pipeline_mode<synchronous>, transform_indices = @transform_8, window_bounds = array<i64: 1, 16>}, {pipeline_mode = #tpu.pipeline_mode<synchronous>, transform_indices = @transform_9, window_bounds = array<i64: 16, 65>}, {pipeline_mode = #tpu.pipeline_mode<synchronous>, transform_indices = @transform_10, window_bounds = array<i64: 1, 65>}, {pipeline_mode = #tpu.pipeline_mode<synchronous>, transform_indices = @transform_11, window_bounds = array<i64: 65, 512>}, {pipeline_mode = #tpu.pipeline_mode<synchronous>, transform_indices = @transform_12, window_bounds = array<i64: 128, 512>}, {pipeline_mode = #tpu.pipeline_mode<synchronous>, transform_indices = @transform_13, window_bounds = array<i64: 1, 512>}, {pipeline_mode = #tpu.pipeline_mode<synchronous>, transform_indices = @transform_14, window_bounds = array<i64: 256, 512>}, {pipeline_mode = #tpu.pipeline_mode<synchronous>, transform_indices = @transform_15, window_bounds = array<i64: 1, 512>}, {pipeline_mode = #tpu.pipeline_mode<synchronous>, transform_indices = @transform_16, window_bounds = array<i64: 1, 128>}, {pipeline_mode = #tpu.pipeline_mode<synchronous>, transform_indices = @transform_17, window_bounds = array<i64: 1, 128>}, {pipeline_mode = #tpu.pipeline_mode<synchronous>, transform_indices = @transform_18, window_bounds = array<i64: 128, 17>}, {pipeline_mode = #tpu.pipeline_mode<synchronous>, transform_indices = @transform_19, window_bounds = array<i64: 1, 17>}, {pipeline_mode = #tpu.pipeline_mode<synchronous>, transform_indices = @transform_20, window_bounds = array<i64: 2, 17>}]} {
    %c0 = arith.constant 0 : index
    %c0_0 = arith.constant 0 : index
    %0 = vector.load %arg1[%c0, %c0_0] : memref<128x3xf32, #tpu.memory_space<vmem>>, vector<128x3xf32>
    %c0_1 = arith.constant 0 : index
    %c0_2 = arith.constant 0 : index
    %1 = vector.load %arg2[%c0_1, %c0_2] : memref<3x8xf32, #tpu.memory_space<vmem>>, vector<3x8xf32>
    %cst = arith.constant dense<0.000000e+00> : vector<128x8xf32>
    %2 = tpu.matmul %0, %1, %cst {dimension_numbers = #tpu.dot_dimension_numbers<[1], [0], [0], [1], [0, 0, 1, 1], [], []>} : vector<128x3xf32>, vector<3x8xf32>, vector<128x8xf32> -> vector<128x8xf32>
    %c0_3 = arith.constant 0 : index
    %c0_4 = arith.constant 0 : index
    %3 = vector.load %arg3[%c0_3, %c0_4] : memref<1x8xf32, #tpu.memory_space<vmem>>, vector<1x8xf32>
    %4 = vector.broadcast %3 : vector<1x8xf32> to vector<128x8xf32>
    %5 = arith.addf %2, %4 : vector<128x8xf32>
    %cst_5 = arith.constant 0.000000e+00 : f32
    %6 = vector.broadcast %cst_5 : f32 to vector<128x8xf32>
    %7 = arith.maximumf %5, %6 : vector<128x8xf32>
    %c0_6 = arith.constant 0 : index
    %c0_7 = arith.constant 0 : index
    %8 = vector.load %arg4[%c0_6, %c0_7] : memref<8x64xf32, #tpu.memory_space<vmem>>, vector<8x64xf32>
    %cst_8 = arith.constant dense<0.000000e+00> : vector<128x64xf32>
    %9 = tpu.matmul %7, %8, %cst_8 {dimension_numbers = #tpu.dot_dimension_numbers<[1], [0], [0], [1], [0, 0, 1, 1], [], []>} : vector<128x8xf32>, vector<8x64xf32>, vector<128x64xf32> -> vector<128x64xf32>
    %c0_9 = arith.constant 0 : index
    %c0_10 = arith.constant 0 : index
    %10 = vector.load %arg5[%c0_9, %c0_10] : memref<1x64xf32, #tpu.memory_space<vmem>>, vector<1x64xf32>
    %11 = vector.broadcast %10 : vector<1x64xf32> to vector<128x64xf32>
    %12 = arith.addf %9, %11 : vector<128x64xf32>
    %13 = vector.shape_cast %12 : vector<128x64xf32> to vector<8x16x64xf32>
    %cst_11 = arith.constant dense<0xFF800000> : vector<8x64xf32>
    %14 = vector.multi_reduction <maximumf>, %13, %cst_11 [1] : vector<8x16x64xf32> to vector<8x64xf32>
    %c0_12 = arith.constant 0 : index
    %c0_13 = arith.constant 0 : index
    %15 = vector.load %arg6[%c0_12, %c0_13] : memref<64x32xf32, #tpu.memory_space<vmem>>, vector<64x32xf32>
    %cst_14 = arith.constant dense<0.000000e+00> : vector<8x32xf32>
    %16 = tpu.matmul %14, %15, %cst_14 {dimension_numbers = #tpu.dot_dimension_numbers<[1], [0], [0], [1], [0, 0, 1, 1], [], []>} : vector<8x64xf32>, vector<64x32xf32>, vector<8x32xf32> -> vector<8x32xf32>
    %c0_15 = arith.constant 0 : index
    %c0_16 = arith.constant 0 : index
    %17 = vector.load %arg7[%c0_15, %c0_16] : memref<1x32xf32, #tpu.memory_space<vmem>>, vector<1x32xf32>
    %18 = vector.broadcast %17 : vector<1x32xf32> to vector<8x32xf32>
    %19 = arith.addf %16, %18 : vector<8x32xf32>
    %cst_17 = arith.constant 0.000000e+00 : f32
    %20 = vector.broadcast %cst_17 : f32 to vector<8x32xf32>
    %21 = arith.maximumf %19, %20 : vector<8x32xf32>
    %c0_18 = arith.constant 0 : index
    %c0_19 = arith.constant 0 : index
    %22 = vector.load %arg8[%c0_18, %c0_19] : memref<32x16xf32, #tpu.memory_space<vmem>>, vector<32x16xf32>
    %cst_20 = arith.constant dense<0.000000e+00> : vector<8x16xf32>
    %23 = tpu.matmul %21, %22, %cst_20 {dimension_numbers = #tpu.dot_dimension_numbers<[1], [0], [0], [1], [0, 0, 1, 1], [], []>} : vector<8x32xf32>, vector<32x16xf32>, vector<8x16xf32> -> vector<8x16xf32>
    %c0_21 = arith.constant 0 : index
    %c0_22 = arith.constant 0 : index
    %24 = vector.load %arg9[%c0_21, %c0_22] : memref<1x16xf32, #tpu.memory_space<vmem>>, vector<1x16xf32>
    %25 = vector.broadcast %24 : vector<1x16xf32> to vector<8x16xf32>
    %26 = arith.addf %23, %25 : vector<8x16xf32>
    %cst_23 = arith.constant 0.000000e+00 : f32
    %27 = vector.broadcast %cst_23 : f32 to vector<8x16xf32>
    %28 = arith.maximumf %26, %27 : vector<8x16xf32>
    %c0_24 = arith.constant 0 : index
    %c0_25 = arith.constant 0 : index
    %29 = vector.load %arg10[%c0_24, %c0_25] : memref<16x65xf32, #tpu.memory_space<vmem>>, vector<16x65xf32>
    %cst_26 = arith.constant dense<0.000000e+00> : vector<8x65xf32>
    %30 = tpu.matmul %28, %29, %cst_26 {dimension_numbers = #tpu.dot_dimension_numbers<[1], [0], [0], [1], [0, 0, 1, 1], [], []>} : vector<8x16xf32>, vector<16x65xf32>, vector<8x65xf32> -> vector<8x65xf32>
    %c0_27 = arith.constant 0 : index
    %c0_28 = arith.constant 0 : index
    %31 = vector.load %arg11[%c0_27, %c0_28] : memref<1x65xf32, #tpu.memory_space<vmem>>, vector<1x65xf32>
    %32 = vector.broadcast %31 : vector<1x65xf32> to vector<8x65xf32>
    %33 = arith.addf %30, %32 : vector<8x65xf32>
    %cst_29 = arith.constant 0.000000e+00 : f32
    %34 = vector.broadcast %cst_29 : f32 to vector<8x65xf32>
    %35 = arith.maximumf %33, %34 : vector<8x65xf32>
    %c0_30 = arith.constant 0 : index
    %c0_31 = arith.constant 0 : index
    %36 = vector.load %arg12[%c0_30, %c0_31] : memref<65x512xf32, #tpu.memory_space<vmem>>, vector<65x512xf32>
    %cst_32 = arith.constant dense<0.000000e+00> : vector<8x512xf32>
    %37 = tpu.matmul %35, %36, %cst_32 {dimension_numbers = #tpu.dot_dimension_numbers<[1], [0], [0], [1], [0, 0, 1, 1], [], []>} : vector<8x65xf32>, vector<65x512xf32>, vector<8x512xf32> -> vector<8x512xf32>
    %c0_33 = arith.constant 0 : index
    %c0_34 = arith.constant 0 : index
    %38 = vector.load %arg14[%c0_33, %c0_34] : memref<1x512xf32, #tpu.memory_space<vmem>>, vector<1x512xf32>
    %39 = vector.broadcast %38 : vector<1x512xf32> to vector<8x512xf32>
    %40 = arith.addf %37, %39 : vector<8x512xf32>
    %c0_35 = arith.constant 0 : index
    %c0_36 = arith.constant 0 : index
    %41 = vector.load %arg13[%c0_35, %c0_36] : memref<128x512xf32, #tpu.memory_space<vmem>>, vector<128x512xf32>
    %c0_37 = arith.constant 0 : index
    %c0_38 = arith.constant 0 : index
    %42 = vector.load %arg15[%c0_37, %c0_38] : memref<256x512xf32, #tpu.memory_space<vmem>>, vector<256x512xf32>
    %c0_39 = arith.constant 0 : index
    %c0_40 = arith.constant 0 : index
    %43 = vector.load %arg16[%c0_39, %c0_40] : memref<1x512xf32, #tpu.memory_space<vmem>>, vector<1x512xf32>
    %cst_41 = arith.constant 0.000000e+00 : f32
    %44 = vector.broadcast %cst_41 : f32 to vector<2x128xf32>
    %45 = vector.extract_strided_slice %40 {offsets = [0, 0], sizes = [2, 512], strides = [1, 1]} : vector<8x512xf32> to vector<2x512xf32>
    %cst_42 = arith.constant dense<0.000000e+00> : vector<2x512xf32>
    %46 = tpu.matmul %44, %41, %cst_42 {dimension_numbers = #tpu.dot_dimension_numbers<[1], [0], [0], [1], [0, 0, 1, 1], [], []>} : vector<2x128xf32>, vector<128x512xf32>, vector<2x512xf32> -> vector<2x512xf32>
    %47 = arith.addf %45, %46 : vector<2x512xf32>
    %48 = vector.extract_strided_slice %47 {offsets = [0, 0], sizes = [2, 384], strides = [1, 1]} : vector<2x512xf32> to vector<2x384xf32>
    %49 = arith.negf %48 : vector<2x384xf32>
    %50 = math.exp %49 : vector<2x384xf32>
    %cst_43 = arith.constant 1.000000e+00 : f32
    %51 = vector.broadcast %cst_43 : f32 to vector<2x384xf32>
    %52 = arith.addf %51, %50 : vector<2x384xf32>
    %53 = arith.divf %51, %52 : vector<2x384xf32>
    %54 = vector.extract_strided_slice %47 {offsets = [0, 384], sizes = [2, 128], strides = [1, 1]} : vector<2x512xf32> to vector<2x128xf32>
    %55 = math.tanh %54 : vector<2x128xf32>
    %56 = vector.extract_strided_slice %53 {offsets = [0, 0], sizes = [2, 128], strides = [1, 1]} : vector<2x384xf32> to vector<2x128xf32>
    %57 = vector.extract_strided_slice %53 {offsets = [0, 128], sizes = [2, 128], strides = [1, 1]} : vector<2x384xf32> to vector<2x128xf32>
    %58 = vector.extract_strided_slice %53 {offsets = [0, 256], sizes = [2, 128], strides = [1, 1]} : vector<2x384xf32> to vector<2x128xf32>
    %59 = arith.mulf %57, %44 : vector<2x128xf32>
    %60 = arith.mulf %56, %55 : vector<2x128xf32>
    %61 = arith.addf %59, %60 : vector<2x128xf32>
    %62 = math.tanh %61 : vector<2x128xf32>
    %63 = arith.mulf %58, %62 : vector<2x128xf32>
    %64 = tpu.concatenate %63, %44 in 1 : vector<2x128xf32>, vector<2x128xf32> -> vector<2x256xf32>
    %cst_44 = arith.constant dense<0.000000e+00> : vector<2x512xf32>
    %65 = tpu.matmul %64, %42, %cst_44 {dimension_numbers = #tpu.dot_dimension_numbers<[1], [0], [0], [1], [0, 0, 1, 1], [], []>} : vector<2x256xf32>, vector<256x512xf32>, vector<2x512xf32> -> vector<2x512xf32>
    %66 = vector.broadcast %43 : vector<1x512xf32> to vector<2x512xf32>
    %67 = arith.addf %65, %66 : vector<2x512xf32>
    %68 = vector.extract_strided_slice %67 {offsets = [0, 0], sizes = [2, 384], strides = [1, 1]} : vector<2x512xf32> to vector<2x384xf32>
    %69 = arith.negf %68 : vector<2x384xf32>
    %70 = math.exp %69 : vector<2x384xf32>
    %cst_45 = arith.constant 1.000000e+00 : f32
    %71 = vector.broadcast %cst_45 : f32 to vector<2x384xf32>
    %72 = arith.addf %71, %70 : vector<2x384xf32>
    %73 = arith.divf %71, %72 : vector<2x384xf32>
    %74 = vector.extract_strided_slice %67 {offsets = [0, 384], sizes = [2, 128], strides = [1, 1]} : vector<2x512xf32> to vector<2x128xf32>
    %75 = math.tanh %74 : vector<2x128xf32>
    %76 = vector.extract_strided_slice %73 {offsets = [0, 0], sizes = [2, 128], strides = [1, 1]} : vector<2x384xf32> to vector<2x128xf32>
    %77 = vector.extract_strided_slice %73 {offsets = [0, 128], sizes = [2, 128], strides = [1, 1]} : vector<2x384xf32> to vector<2x128xf32>
    %78 = vector.extract_strided_slice %73 {offsets = [0, 256], sizes = [2, 128], strides = [1, 1]} : vector<2x384xf32> to vector<2x128xf32>
    %79 = arith.mulf %77, %44 : vector<2x128xf32>
    %80 = arith.mulf %76, %75 : vector<2x128xf32>
    %81 = arith.addf %79, %80 : vector<2x128xf32>
    %82 = math.tanh %81 : vector<2x128xf32>
    %83 = arith.mulf %78, %82 : vector<2x128xf32>
    %84 = vector.extract_strided_slice %40 {offsets = [2, 0], sizes = [2, 512], strides = [1, 1]} : vector<8x512xf32> to vector<2x512xf32>
    %cst_46 = arith.constant dense<0.000000e+00> : vector<2x512xf32>
    %85 = tpu.matmul %63, %41, %cst_46 {dimension_numbers = #tpu.dot_dimension_numbers<[1], [0], [0], [1], [0, 0, 1, 1], [], []>} : vector<2x128xf32>, vector<128x512xf32>, vector<2x512xf32> -> vector<2x512xf32>
    %86 = arith.addf %84, %85 : vector<2x512xf32>
    %87 = vector.extract_strided_slice %86 {offsets = [0, 0], sizes = [2, 384], strides = [1, 1]} : vector<2x512xf32> to vector<2x384xf32>
    %88 = arith.negf %87 : vector<2x384xf32>
    %89 = math.exp %88 : vector<2x384xf32>
    %cst_47 = arith.constant 1.000000e+00 : f32
    %90 = vector.broadcast %cst_47 : f32 to vector<2x384xf32>
    %91 = arith.addf %90, %89 : vector<2x384xf32>
    %92 = arith.divf %90, %91 : vector<2x384xf32>
    %93 = vector.extract_strided_slice %86 {offsets = [0, 384], sizes = [2, 128], strides = [1, 1]} : vector<2x512xf32> to vector<2x128xf32>
    %94 = math.tanh %93 : vector<2x128xf32>
    %95 = vector.extract_strided_slice %92 {offsets = [0, 0], sizes = [2, 128], strides = [1, 1]} : vector<2x384xf32> to vector<2x128xf32>
    %96 = vector.extract_strided_slice %92 {offsets = [0, 128], sizes = [2, 128], strides = [1, 1]} : vector<2x384xf32> to vector<2x128xf32>
    %97 = vector.extract_strided_slice %92 {offsets = [0, 256], sizes = [2, 128], strides = [1, 1]} : vector<2x384xf32> to vector<2x128xf32>
    %98 = arith.mulf %96, %61 : vector<2x128xf32>
    %99 = arith.mulf %95, %94 : vector<2x128xf32>
    %100 = arith.addf %98, %99 : vector<2x128xf32>
    %101 = math.tanh %100 : vector<2x128xf32>
    %102 = arith.mulf %97, %101 : vector<2x128xf32>
    %103 = tpu.concatenate %102, %83 in 1 : vector<2x128xf32>, vector<2x128xf32> -> vector<2x256xf32>
    %cst_48 = arith.constant dense<0.000000e+00> : vector<2x512xf32>
    %104 = tpu.matmul %103, %42, %cst_48 {dimension_numbers = #tpu.dot_dimension_numbers<[1], [0], [0], [1], [0, 0, 1, 1], [], []>} : vector<2x256xf32>, vector<256x512xf32>, vector<2x512xf32> -> vector<2x512xf32>
    %105 = vector.broadcast %43 : vector<1x512xf32> to vector<2x512xf32>
    %106 = arith.addf %104, %105 : vector<2x512xf32>
    %107 = vector.extract_strided_slice %106 {offsets = [0, 0], sizes = [2, 384], strides = [1, 1]} : vector<2x512xf32> to vector<2x384xf32>
    %108 = arith.negf %107 : vector<2x384xf32>
    %109 = math.exp %108 : vector<2x384xf32>
    %cst_49 = arith.constant 1.000000e+00 : f32
    %110 = vector.broadcast %cst_49 : f32 to vector<2x384xf32>
    %111 = arith.addf %110, %109 : vector<2x384xf32>
    %112 = arith.divf %110, %111 : vector<2x384xf32>
    %113 = vector.extract_strided_slice %106 {offsets = [0, 384], sizes = [2, 128], strides = [1, 1]} : vector<2x512xf32> to vector<2x128xf32>
    %114 = math.tanh %113 : vector<2x128xf32>
    %115 = vector.extract_strided_slice %112 {offsets = [0, 0], sizes = [2, 128], strides = [1, 1]} : vector<2x384xf32> to vector<2x128xf32>
    %116 = vector.extract_strided_slice %112 {offsets = [0, 128], sizes = [2, 128], strides = [1, 1]} : vector<2x384xf32> to vector<2x128xf32>
    %117 = vector.extract_strided_slice %112 {offsets = [0, 256], sizes = [2, 128], strides = [1, 1]} : vector<2x384xf32> to vector<2x128xf32>
    %118 = arith.mulf %116, %81 : vector<2x128xf32>
    %119 = arith.mulf %115, %114 : vector<2x128xf32>
    %120 = arith.addf %118, %119 : vector<2x128xf32>
    %121 = math.tanh %120 : vector<2x128xf32>
    %122 = arith.mulf %117, %121 : vector<2x128xf32>
    %123 = vector.extract_strided_slice %40 {offsets = [4, 0], sizes = [2, 512], strides = [1, 1]} : vector<8x512xf32> to vector<2x512xf32>
    %cst_50 = arith.constant dense<0.000000e+00> : vector<2x512xf32>
    %124 = tpu.matmul %102, %41, %cst_50 {dimension_numbers = #tpu.dot_dimension_numbers<[1], [0], [0], [1], [0, 0, 1, 1], [], []>} : vector<2x128xf32>, vector<128x512xf32>, vector<2x512xf32> -> vector<2x512xf32>
    %125 = arith.addf %123, %124 : vector<2x512xf32>
    %126 = vector.extract_strided_slice %125 {offsets = [0, 0], sizes = [2, 384], strides = [1, 1]} : vector<2x512xf32> to vector<2x384xf32>
    %127 = arith.negf %126 : vector<2x384xf32>
    %128 = math.exp %127 : vector<2x384xf32>
    %cst_51 = arith.constant 1.000000e+00 : f32
    %129 = vector.broadcast %cst_51 : f32 to vector<2x384xf32>
    %130 = arith.addf %129, %128 : vector<2x384xf32>
    %131 = arith.divf %129, %130 : vector<2x384xf32>
    %132 = vector.extract_strided_slice %125 {offsets = [0, 384], sizes = [2, 128], strides = [1, 1]} : vector<2x512xf32> to vector<2x128xf32>
    %133 = math.tanh %132 : vector<2x128xf32>
    %134 = vector.extract_strided_slice %131 {offsets = [0, 0], sizes = [2, 128], strides = [1, 1]} : vector<2x384xf32> to vector<2x128xf32>
    %135 = vector.extract_strided_slice %131 {offsets = [0, 128], sizes = [2, 128], strides = [1, 1]} : vector<2x384xf32> to vector<2x128xf32>
    %136 = vector.extract_strided_slice %131 {offsets = [0, 256], sizes = [2, 128], strides = [1, 1]} : vector<2x384xf32> to vector<2x128xf32>
    %137 = arith.mulf %135, %100 : vector<2x128xf32>
    %138 = arith.mulf %134, %133 : vector<2x128xf32>
    %139 = arith.addf %137, %138 : vector<2x128xf32>
    %140 = math.tanh %139 : vector<2x128xf32>
    %141 = arith.mulf %136, %140 : vector<2x128xf32>
    %142 = tpu.concatenate %141, %122 in 1 : vector<2x128xf32>, vector<2x128xf32> -> vector<2x256xf32>
    %cst_52 = arith.constant dense<0.000000e+00> : vector<2x512xf32>
    %143 = tpu.matmul %142, %42, %cst_52 {dimension_numbers = #tpu.dot_dimension_numbers<[1], [0], [0], [1], [0, 0, 1, 1], [], []>} : vector<2x256xf32>, vector<256x512xf32>, vector<2x512xf32> -> vector<2x512xf32>
    %144 = vector.broadcast %43 : vector<1x512xf32> to vector<2x512xf32>
    %145 = arith.addf %143, %144 : vector<2x512xf32>
    %146 = vector.extract_strided_slice %145 {offsets = [0, 0], sizes = [2, 384], strides = [1, 1]} : vector<2x512xf32> to vector<2x384xf32>
    %147 = arith.negf %146 : vector<2x384xf32>
    %148 = math.exp %147 : vector<2x384xf32>
    %cst_53 = arith.constant 1.000000e+00 : f32
    %149 = vector.broadcast %cst_53 : f32 to vector<2x384xf32>
    %150 = arith.addf %149, %148 : vector<2x384xf32>
    %151 = arith.divf %149, %150 : vector<2x384xf32>
    %152 = vector.extract_strided_slice %145 {offsets = [0, 384], sizes = [2, 128], strides = [1, 1]} : vector<2x512xf32> to vector<2x128xf32>
    %153 = math.tanh %152 : vector<2x128xf32>
    %154 = vector.extract_strided_slice %151 {offsets = [0, 0], sizes = [2, 128], strides = [1, 1]} : vector<2x384xf32> to vector<2x128xf32>
    %155 = vector.extract_strided_slice %151 {offsets = [0, 128], sizes = [2, 128], strides = [1, 1]} : vector<2x384xf32> to vector<2x128xf32>
    %156 = vector.extract_strided_slice %151 {offsets = [0, 256], sizes = [2, 128], strides = [1, 1]} : vector<2x384xf32> to vector<2x128xf32>
    %157 = arith.mulf %155, %120 : vector<2x128xf32>
    %158 = arith.mulf %154, %153 : vector<2x128xf32>
    %159 = arith.addf %157, %158 : vector<2x128xf32>
    %160 = math.tanh %159 : vector<2x128xf32>
    %161 = arith.mulf %156, %160 : vector<2x128xf32>
    %162 = vector.extract_strided_slice %40 {offsets = [6, 0], sizes = [2, 512], strides = [1, 1]} : vector<8x512xf32> to vector<2x512xf32>
    %cst_54 = arith.constant dense<0.000000e+00> : vector<2x512xf32>
    %163 = tpu.matmul %141, %41, %cst_54 {dimension_numbers = #tpu.dot_dimension_numbers<[1], [0], [0], [1], [0, 0, 1, 1], [], []>} : vector<2x128xf32>, vector<128x512xf32>, vector<2x512xf32> -> vector<2x512xf32>
    %164 = arith.addf %162, %163 : vector<2x512xf32>
    %165 = vector.extract_strided_slice %164 {offsets = [0, 0], sizes = [2, 384], strides = [1, 1]} : vector<2x512xf32> to vector<2x384xf32>
    %166 = arith.negf %165 : vector<2x384xf32>
    %167 = math.exp %166 : vector<2x384xf32>
    %cst_55 = arith.constant 1.000000e+00 : f32
    %168 = vector.broadcast %cst_55 : f32 to vector<2x384xf32>
    %169 = arith.addf %168, %167 : vector<2x384xf32>
    %170 = arith.divf %168, %169 : vector<2x384xf32>
    %171 = vector.extract_strided_slice %164 {offsets = [0, 384], sizes = [2, 128], strides = [1, 1]} : vector<2x512xf32> to vector<2x128xf32>
    %172 = math.tanh %171 : vector<2x128xf32>
    %173 = vector.extract_strided_slice %170 {offsets = [0, 0], sizes = [2, 128], strides = [1, 1]} : vector<2x384xf32> to vector<2x128xf32>
    %174 = vector.extract_strided_slice %170 {offsets = [0, 128], sizes = [2, 128], strides = [1, 1]} : vector<2x384xf32> to vector<2x128xf32>
    %175 = vector.extract_strided_slice %170 {offsets = [0, 256], sizes = [2, 128], strides = [1, 1]} : vector<2x384xf32> to vector<2x128xf32>
    %176 = arith.mulf %174, %139 : vector<2x128xf32>
    %177 = arith.mulf %173, %172 : vector<2x128xf32>
    %178 = arith.addf %176, %177 : vector<2x128xf32>
    %179 = math.tanh %178 : vector<2x128xf32>
    %180 = arith.mulf %175, %179 : vector<2x128xf32>
    %181 = tpu.concatenate %180, %161 in 1 : vector<2x128xf32>, vector<2x128xf32> -> vector<2x256xf32>
    %cst_56 = arith.constant dense<0.000000e+00> : vector<2x512xf32>
    %182 = tpu.matmul %181, %42, %cst_56 {dimension_numbers = #tpu.dot_dimension_numbers<[1], [0], [0], [1], [0, 0, 1, 1], [], []>} : vector<2x256xf32>, vector<256x512xf32>, vector<2x512xf32> -> vector<2x512xf32>
    %183 = vector.broadcast %43 : vector<1x512xf32> to vector<2x512xf32>
    %184 = arith.addf %182, %183 : vector<2x512xf32>
    %185 = vector.extract_strided_slice %184 {offsets = [0, 0], sizes = [2, 384], strides = [1, 1]} : vector<2x512xf32> to vector<2x384xf32>
    %186 = arith.negf %185 : vector<2x384xf32>
    %187 = math.exp %186 : vector<2x384xf32>
    %cst_57 = arith.constant 1.000000e+00 : f32
    %188 = vector.broadcast %cst_57 : f32 to vector<2x384xf32>
    %189 = arith.addf %188, %187 : vector<2x384xf32>
    %190 = arith.divf %188, %189 : vector<2x384xf32>
    %191 = vector.extract_strided_slice %184 {offsets = [0, 384], sizes = [2, 128], strides = [1, 1]} : vector<2x512xf32> to vector<2x128xf32>
    %192 = math.tanh %191 : vector<2x128xf32>
    %193 = vector.extract_strided_slice %190 {offsets = [0, 0], sizes = [2, 128], strides = [1, 1]} : vector<2x384xf32> to vector<2x128xf32>
    %194 = vector.extract_strided_slice %190 {offsets = [0, 128], sizes = [2, 128], strides = [1, 1]} : vector<2x384xf32> to vector<2x128xf32>
    %195 = vector.extract_strided_slice %190 {offsets = [0, 256], sizes = [2, 128], strides = [1, 1]} : vector<2x384xf32> to vector<2x128xf32>
    %196 = arith.mulf %194, %159 : vector<2x128xf32>
    %197 = arith.mulf %193, %192 : vector<2x128xf32>
    %198 = arith.addf %196, %197 : vector<2x128xf32>
    %199 = math.tanh %198 : vector<2x128xf32>
    %200 = arith.mulf %195, %199 : vector<2x128xf32>
    %c0_58 = arith.constant 0 : index
    %c0_59 = arith.constant 0 : index
    %201 = vector.load %arg17[%c0_58, %c0_59] : memref<1x128xf32, #tpu.memory_space<vmem>>, vector<1x128xf32>
    %202 = vector.broadcast %201 : vector<1x128xf32> to vector<2x128xf32>
    %203 = arith.mulf %200, %202 : vector<2x128xf32>
    %c0_60 = arith.constant 0 : index
    %c0_61 = arith.constant 0 : index
    %204 = vector.load %arg18[%c0_60, %c0_61] : memref<1x128xf32, #tpu.memory_space<vmem>>, vector<1x128xf32>
    %205 = vector.broadcast %204 : vector<1x128xf32> to vector<2x128xf32>
    %206 = arith.addf %203, %205 : vector<2x128xf32>
    %cst_62 = arith.constant 0.000000e+00 : f32
    %207 = vector.broadcast %cst_62 : f32 to vector<2x128xf32>
    %208 = arith.maximumf %206, %207 : vector<2x128xf32>
    %c0_63 = arith.constant 0 : index
    %c0_64 = arith.constant 0 : index
    %209 = vector.load %arg19[%c0_63, %c0_64] : memref<128x17xf32, #tpu.memory_space<vmem>>, vector<128x17xf32>
    %cst_65 = arith.constant dense<0.000000e+00> : vector<2x17xf32>
    %210 = tpu.matmul %208, %209, %cst_65 {dimension_numbers = #tpu.dot_dimension_numbers<[1], [0], [0], [1], [0, 0, 1, 1], [], []>} : vector<2x128xf32>, vector<128x17xf32>, vector<2x17xf32> -> vector<2x17xf32>
    %c0_66 = arith.constant 0 : index
    %c0_67 = arith.constant 0 : index
    %211 = vector.load %arg20[%c0_66, %c0_67] : memref<1x17xf32, #tpu.memory_space<vmem>>, vector<1x17xf32>
    %212 = vector.broadcast %211 : vector<1x17xf32> to vector<2x17xf32>
    %213 = arith.addf %210, %212 : vector<2x17xf32>
    %c0_68 = arith.constant 0 : index
    %c0_69 = arith.constant 0 : index
    %214 = vector.load %arg21[%c0_68, %c0_69] : memref<2x17xf32, #tpu.memory_space<vmem>>, vector<2x17xf32>
    tpu.vector_store %arg21[%c0_68, %c0_69], %213 {strides = array<i32>} : memref<2x17xf32, #tpu.memory_space<vmem>>, vector<2x17xf32>,
    return
  }
  func.func @transform_0(%arg0: i32) -> (i32, i32) {
    %c0_i32 = arith.constant 0 : i32
    %c0_i32_0 = arith.constant 0 : i32
    %c0_i32_1 = arith.constant 0 : i32
    return %c0_i32, %c0_i32_0 : i32, i32
  }
  func.func @transform_1(%arg0: i32) -> (i32, i32) {
    %c0_i32 = arith.constant 0 : i32
    %c0_i32_0 = arith.constant 0 : i32
    %c0_i32_1 = arith.constant 0 : i32
    return %c0_i32, %c0_i32_0 : i32, i32
  }
  func.func @transform_2(%arg0: i32) -> (i32, i32) {
    %c0_i32 = arith.constant 0 : i32
    %c0_i32_0 = arith.constant 0 : i32
    %c0_i32_1 = arith.constant 0 : i32
    return %c0_i32, %c0_i32_0 : i32, i32
  }
  func.func @transform_3(%arg0: i32) -> (i32, i32) {
    %c0_i32 = arith.constant 0 : i32
    %c0_i32_0 = arith.constant 0 : i32
    %c0_i32_1 = arith.constant 0 : i32
    return %c0_i32, %c0_i32_0 : i32, i32
  }
  func.func @transform_4(%arg0: i32) -> (i32, i32) {
    %c0_i32 = arith.constant 0 : i32
    %c0_i32_0 = arith.constant 0 : i32
    %c0_i32_1 = arith.constant 0 : i32
    return %c0_i32, %c0_i32_0 : i32, i32
  }
  func.func @transform_5(%arg0: i32) -> (i32, i32) {
    %c0_i32 = arith.constant 0 : i32
    %c0_i32_0 = arith.constant 0 : i32
    %c0_i32_1 = arith.constant 0 : i32
    return %c0_i32, %c0_i32_0 : i32, i32
  }
  func.func @transform_6(%arg0: i32) -> (i32, i32) {
    %c0_i32 = arith.constant 0 : i32
    %c0_i32_0 = arith.constant 0 : i32
    %c0_i32_1 = arith.constant 0 : i32
    return %c0_i32, %c0_i32_0 : i32, i32
  }
  func.func @transform_7(%arg0: i32) -> (i32, i32) {
    %c0_i32 = arith.constant 0 : i32
    %c0_i32_0 = arith.constant 0 : i32
    %c0_i32_1 = arith.constant 0 : i32
    return %c0_i32, %c0_i32_0 : i32, i32
  }
  func.func @transform_8(%arg0: i32) -> (i32, i32) {
    %c0_i32 = arith.constant 0 : i32
    %c0_i32_0 = arith.constant 0 : i32
    %c0_i32_1 = arith.constant 0 : i32
    return %c0_i32, %c0_i32_0 : i32, i32
  }
  func.func @transform_9(%arg0: i32) -> (i32, i32) {
    %c0_i32 = arith.constant 0 : i32
    %c0_i32_0 = arith.constant 0 : i32
    %c0_i32_1 = arith.constant 0 : i32
    return %c0_i32, %c0_i32_0 : i32, i32
  }
  func.func @transform_10(%arg0: i32) -> (i32, i32) {
    %c0_i32 = arith.constant 0 : i32
    %c0_i32_0 = arith.constant 0 : i32
    %c0_i32_1 = arith.constant 0 : i32
    return %c0_i32, %c0_i32_0 : i32, i32
  }
  func.func @transform_11(%arg0: i32) -> (i32, i32) {
    %c0_i32 = arith.constant 0 : i32
    %c0_i32_0 = arith.constant 0 : i32
    %c0_i32_1 = arith.constant 0 : i32
    return %c0_i32, %c0_i32_0 : i32, i32
  }
  func.func @transform_12(%arg0: i32) -> (i32, i32) {
    %c0_i32 = arith.constant 0 : i32
    %c0_i32_0 = arith.constant 0 : i32
    %c0_i32_1 = arith.constant 0 : i32
    return %c0_i32, %c0_i32_0 : i32, i32
  }
  func.func @transform_13(%arg0: i32) -> (i32, i32) {
    %c0_i32 = arith.constant 0 : i32
    %c0_i32_0 = arith.constant 0 : i32
    %c0_i32_1 = arith.constant 0 : i32
    return %c0_i32, %c0_i32_0 : i32, i32
  }
  func.func @transform_14(%arg0: i32) -> (i32, i32) {
    %c0_i32 = arith.constant 0 : i32
    %c0_i32_0 = arith.constant 0 : i32
    %c0_i32_1 = arith.constant 0 : i32
    return %c0_i32, %c0_i32_0 : i32, i32
  }
  func.func @transform_15(%arg0: i32) -> (i32, i32) {
    %c0_i32 = arith.constant 0 : i32
    %c0_i32_0 = arith.constant 0 : i32
    %c0_i32_1 = arith.constant 0 : i32
    return %c0_i32, %c0_i32_0 : i32, i32
  }
  func.func @transform_16(%arg0: i32) -> (i32, i32) {
    %c0_i32 = arith.constant 0 : i32
    %c0_i32_0 = arith.constant 0 : i32
    %c0_i32_1 = arith.constant 0 : i32
    return %c0_i32, %c0_i32_0 : i32, i32
  }
  func.func @transform_17(%arg0: i32) -> (i32, i32) {
    %c0_i32 = arith.constant 0 : i32
    %c0_i32_0 = arith.constant 0 : i32
    %c0_i32_1 = arith.constant 0 : i32
    return %c0_i32, %c0_i32_0 : i32, i32
  }
  func.func @transform_18(%arg0: i32) -> (i32, i32) {
    %c0_i32 = arith.constant 0 : i32
    %c0_i32_0 = arith.constant 0 : i32
    %c0_i32_1 = arith.constant 0 : i32
    return %c0_i32, %c0_i32_0 : i32, i32
  }
  func.func @transform_19(%arg0: i32) -> (i32, i32) {
    %c0_i32 = arith.constant 0 : i32
    %c0_i32_0 = arith.constant 0 : i32
    %c0_i32_1 = arith.constant 0 : i32
    return %c0_i32, %c0_i32_0 : i32, i32
  }
  func.func @transform_20(%arg0: i32) -> (i32, i32) {
    %c0_i32 = arith.constant 0 : i32
    %c0_i32_0 = arith.constant 0 : i32
    %c0_i32_1 = arith.constant 0 : i32
    return %c0_i32, %c0_i32_0 : i32, i32
  }
}

</mosaic_0001>

<llo_original>
// kernel: forward_pallas.1
$region0: #{forward_pallas.1}
  #allocation0 [shape = 'u32[]', space=smem, size = 0x4, offset = 0x4, fixed_abs, tag = 'smem constant byte address 0x4 - core index']
  #allocation1 [shape = 'u32[72,128]{1,0:T(1,128)}', space=vmem, size = 0x9000, scoped, tag = 'internal scratch']
  %s0 = inlined_call_operand.vmem [shape: f32[128,3], index: 0, kind: input, shape index: {}]
  %s1 = inlined_call_operand.vmem [shape: f32[3,8], index: 1, kind: input, shape index: {}]
  %s2 = inlined_call_operand.vmem [shape: f32[1,8], index: 2, kind: input, shape index: {}]
  %s3 = inlined_call_operand.vmem [shape: f32[8,64], index: 3, kind: input, shape index: {}]
  %s4 = inlined_call_operand.vmem [shape: f32[1,64], index: 4, kind: input, shape index: {}]
  %s5 = inlined_call_operand.vmem [shape: f32[64,32], index: 5, kind: input, shape index: {}]
  %s6 = inlined_call_operand.vmem [shape: f32[1,32], index: 6, kind: input, shape index: {}]
  %s7 = inlined_call_operand.vmem [shape: f32[32,16], index: 7, kind: input, shape index: {}]
  %s8 = inlined_call_operand.vmem [shape: f32[1,16], index: 8, kind: input, shape index: {}]
  %s9 = inlined_call_operand.vmem [shape: f32[16,65], index: 9, kind: input, shape index: {}]
  %s10 = inlined_call_operand.vmem [shape: f32[1,65], index: 10, kind: input, shape index: {}]
  %s11 = inlined_call_operand.vmem [shape: f32[65,512], index: 11, kind: input, shape index: {}]
  %s12 = inlined_call_operand.vmem [shape: f32[128,512], index: 12, kind: input, shape index: {}]
  %s13 = inlined_call_operand.vmem [shape: f32[1,512], index: 13, kind: input, shape index: {}]
  %s14 = inlined_call_operand.vmem [shape: f32[256,512], index: 14, kind: input, shape index: {}]
  %s15 = inlined_call_operand.vmem [shape: f32[1,512], index: 15, kind: input, shape index: {}]
  %s16 = inlined_call_operand.vmem [shape: f32[1,128], index: 16, kind: input, shape index: {}]
  %s17 = inlined_call_operand.vmem [shape: f32[1,128], index: 17, kind: input, shape index: {}]
  %s18 = inlined_call_operand.vmem [shape: f32[128,17], index: 18, kind: input, shape index: {}]
  %s19 = inlined_call_operand.vmem [shape: f32[1,17], index: 19, kind: input, shape index: {}]
  %s20 = inlined_call_operand.hbm [shape: f32[2,17], index: 20, kind: output, shape index: {}]
  %s21 = sld [smem:[#allocation0]]
  $region90: #{forward_pallas.1} parent=0
    _
  %s23 = ssub.s32 1, %s21
  %s24 = scalar_select 0, %s23, %s21
  $region1: #{forward_pallas.1} parent=0
    #allocation2 [shape = 'u8[1024]{0}', space=vmem, size = 0x400, scoped, tag = 'output window, operand 0, single buffered']
    #allocation3 [shape = 's32[1]{0}', space=sflag, size = 0x4, scoped, tag = 'scoped memory for forward_pallas.1']
    %25 = vsyncpa [#allocation3], 0
    // Predicated region
    $region2: #{forward_pallas.1} parent=1 // pred_check
      _
    $region3: #{forward_pallas.1} parent=1 // pred_check_branch
      %27 = sbr.rel (0) target = $region5
    $region4: #{forward_pallas.1} parent=1 // pred_region
      _
    $region5: #{forward_pallas.1} parent=1 // pred_fallthru
      _
    // Predicated region
    $region6: #{forward_pallas.1} parent=1 // pred_check
      _
    $region7: #{forward_pallas.1} parent=1 // pred_check_branch
      %29 = sbr.rel (0) target = $region9
    $region8: #{forward_pallas.1} parent=1 // pred_region
      _
    $region9: #{forward_pallas.1} parent=1 // pred_fallthru
      _
    // Predicated region
    $region10: #{forward_pallas.1} parent=1 // pred_check
      _
    $region11: #{forward_pallas.1} parent=1 // pred_check_branch
      %31 = sbr.rel (0) target = $region13
    $region12: #{forward_pallas.1} parent=1 // pred_region
      _
    $region13: #{forward_pallas.1} parent=1 // pred_fallthru
      _
    // Predicated region
    $region14: #{forward_pallas.1} parent=1 // pred_check
      _
    $region15: #{forward_pallas.1} parent=1 // pred_check_branch
      %33 = sbr.rel (0) target = $region17
    $region16: #{forward_pallas.1} parent=1 // pred_region
      _
    $region17: #{forward_pallas.1} parent=1 // pred_fallthru
      _
    // Predicated region
    $region18: #{forward_pallas.1} parent=1 // pred_check
      _
    $region19: #{forward_pallas.1} parent=1 // pred_check_branch
      %35 = sbr.rel (0) target = $region21
    $region20: #{forward_pallas.1} parent=1 // pred_region
      _
    $region21: #{forward_pallas.1} parent=1 // pred_fallthru
      _
    // Predicated region
    $region22: #{forward_pallas.1} parent=1 // pred_check
      _
    $region23: #{forward_pallas.1} parent=1 // pred_check_branch
      %37 = sbr.rel (0) target = $region25
    $region24: #{forward_pallas.1} parent=1 // pred_region
      _
    $region25: #{forward_pallas.1} parent=1 // pred_fallthru
      _
    // Predicated region
    $region26: #{forward_pallas.1} parent=1 // pred_check
      _
    $region27: #{forward_pallas.1} parent=1 // pred_check_branch
      %39 = sbr.rel (0) target = $region29
    $region28: #{forward_pallas.1} parent=1 // pred_region
      _
    $region29: #{forward_pallas.1} parent=1 // pred_fallthru
      _
    // Predicated region
    $region30: #{forward_pallas.1} parent=1 // pred_check
      _
    $region31: #{forward_pallas.1} parent=1 // pred_check_branch
      %41 = sbr.rel (0) target = $region33
    $region32: #{forward_pallas.1} parent=1 // pred_region
      _
    $region33: #{forward_pallas.1} parent=1 // pred_fallthru
      _
    // Predicated region
    $region34: #{forward_pallas.1} parent=1 // pred_check
      _
    $region35: #{forward_pallas.1} parent=1 // pred_check_branch
      %43 = sbr.rel (0) target = $region37
    $region36: #{forward_pallas.1} parent=1 // pred_region
      _
    $region37: #{forward_pallas.1} parent=1 // pred_fallthru
      _
    // Predicated region
    $region38: #{forward_pallas.1} parent=1 // pred_check
      _
    $region39: #{forward_pallas.1} parent=1 // pred_check_branch
      %45 = sbr.rel (0) target = $region41
    $region40: #{forward_pallas.1} parent=1 // pred_region
      _
    $region41: #{forward_pallas.1} parent=1 // pred_fallthru
      _
    // Predicated region
    $region42: #{forward_pallas.1} parent=1 // pred_check
      _
    $region43: #{forward_pallas.1} parent=1 // pred_check_branch
      %47 = sbr.rel (0) target = $region45
    $region44: #{forward_pallas.1} parent=1 // pred_region
      _
    $region45: #{forward_pallas.1} parent=1 // pred_fallthru
      _
    // Predicated region
    $region46: #{forward_pallas.1} parent=1 // pred_check
      _
    $region47: #{forward_pallas.1} parent=1 // pred_check_branch
      %49 = sbr.rel (0) target = $region49
    $region48: #{forward_pallas.1} parent=1 // pred_region
      _
    $region49: #{forward_pallas.1} parent=1 // pred_fallthru
      _
    // Predicated region
    $region50: #{forward_pallas.1} parent=1 // pred_check
      _
    $region51: #{forward_pallas.1} parent=1 // pred_check_branch
      %51 = sbr.rel (0) target = $region53
    $region52: #{forward_pallas.1} parent=1 // pred_region
      _
    $region53: #{forward_pallas.1} parent=1 // pred_fallthru
      _
    // Predicated region
    $region54: #{forward_pallas.1} parent=1 // pred_check
      _
    $region55: #{forward_pallas.1} parent=1 // pred_check_branch
      %53 = sbr.rel (0) target = $region57
    $region56: #{forward_pallas.1} parent=1 // pred_region
      _
    $region57: #{forward_pallas.1} parent=1 // pred_fallthru
      _
    // Predicated region
    $region58: #{forward_pallas.1} parent=1 // pred_check
      _
    $region59: #{forward_pallas.1} parent=1 // pred_check_branch
      %55 = sbr.rel (0) target = $region61
    $region60: #{forward_pallas.1} parent=1 // pred_region
      _
    $region61: #{forward_pallas.1} parent=1 // pred_fallthru
      _
    // Predicated region
    $region62: #{forward_pallas.1} parent=1 // pred_check
      _
    $region63: #{forward_pallas.1} parent=1 // pred_check_branch
      %57 = sbr.rel (0) target = $region65
    $region64: #{forward_pallas.1} parent=1 // pred_region
      _
    $region65: #{forward_pallas.1} parent=1 // pred_fallthru
      _
    // Predicated region
    $region66: #{forward_pallas.1} parent=1 // pred_check
      _
    $region67: #{forward_pallas.1} parent=1 // pred_check_branch
      %59 = sbr.rel (0) target = $region69
    $region68: #{forward_pallas.1} parent=1 // pred_region
      _
    $region69: #{forward_pallas.1} parent=1 // pred_fallthru
      _
    // Predicated region
    $region70: #{forward_pallas.1} parent=1 // pred_check
      _
    $region71: #{forward_pallas.1} parent=1 // pred_check_branch
      %61 = sbr.rel (0) target = $region73
    $region72: #{forward_pallas.1} parent=1 // pred_region
      _
    $region73: #{forward_pallas.1} parent=1 // pred_fallthru
      _
    // Predicated region
    $region74: #{forward_pallas.1} parent=1 // pred_check
      _
    $region75: #{forward_pallas.1} parent=1 // pred_check_branch
      %63 = sbr.rel (0) target = $region77
    $region76: #{forward_pallas.1} parent=1 // pred_region
      _
    $region77: #{forward_pallas.1} parent=1 // pred_fallthru
      _
    // Predicated region
    $region78: #{forward_pallas.1} parent=1 // pred_check
      _
    $region79: #{forward_pallas.1} parent=1 // pred_check_branch
      %65 = sbr.rel (0) target = $region81
    $region80: #{forward_pallas.1} parent=1 // pred_region
      _
    $region81: #{forward_pallas.1} parent=1 // pred_fallthru
      _
    %v66 = vld [vmem:[%s0] sm:$0xff]
    %v67 = vld [vmem:[%s0 + $0x8] sm:$0xff]
    %v68 = vld [vmem:[%s0 + $0x10] sm:$0xff]
    %v69 = vld [vmem:[%s0 + $0x18] sm:$0xff]
    %v70 = vld [vmem:[%s0 + $0x20] sm:$0xff]
    %v71 = vld [vmem:[%s0 + $0x28] sm:$0xff]
    %v72 = vld [vmem:[%s0 + $0x30] sm:$0xff]
    %v73 = vld [vmem:[%s0 + $0x38] sm:$0xff]
    %v74 = vld [vmem:[%s0 + $0x40] sm:$0xff]
    %v75 = vld [vmem:[%s0 + $0x48] sm:$0xff]
    %v76 = vld [vmem:[%s0 + $0x50] sm:$0xff]
    %v77 = vld [vmem:[%s0 + $0x58] sm:$0xff]
    %v78 = vld [vmem:[%s0 + $0x60] sm:$0xff]
    %v79 = vld [vmem:[%s0 + $0x68] sm:$0xff]
    %v80 = vld [vmem:[%s0 + $0x70] sm:$0xff]
    %v81 = vld [vmem:[%s0 + $0x78] sm:$0xff]
    %v82 = vld [vmem:[%s1] sm:$0x7]
    %v83 = vld [vmem:[%s2] sm:$0x1]
    %v85 = vperm.slane %v83, 0
    %vm87 = vcmask 23552
    %v89 = vsel %vm87, %v66, 0
    %v92 = vsel %vm87, %v67, 0
    %v95 = vsel %vm87, %v68, 0
    %v98 = vsel %vm87, %v69, 0
    %v101 = vsel %vm87, %v70, 0
    %v104 = vsel %vm87, %v71, 0
    %v107 = vsel %vm87, %v72, 0
    %v110 = vsel %vm87, %v73, 0
    %v113 = vsel %vm87, %v74, 0
    %v116 = vsel %vm87, %v75, 0
    %v119 = vsel %vm87, %v76, 0
    %v122 = vsel %vm87, %v77, 0
    %v125 = vsel %vm87, %v78, 0
    %v128 = vsel %vm87, %v79, 0
    %v131 = vsel %vm87, %v80, 0
    %v134 = vsel %vm87, %v81, 0
    %vm136 = vcmask 1042432
    %v138 = vsel %vm136, %v82, 0
    %140 = vmatpush.msra.mxu0 0.0
    %141 = vmatpush.msra.mxu0 0.0
    %142 = vmatpush.msra.mxu0 0.0
    %143 = vmatpush.msra.mxu0 0.0
    %144 = vmatpush.msra.mxu0 0.0
    %145 = vmatpush.msra.mxu0 0.0
    %146 = vmatpush.msra.mxu0 0.0
    %147 = vmatpush.msra.mxu0 0.0
    %148 = vmatpush.msra.mxu0 0.0
    %149 = vmatpush.msra.mxu0 0.0
    %150 = vmatpush.msra.mxu0 0.0
    %151 = vmatpush.msra.mxu0 0.0
    %152 = vmatpush.msra.mxu0 0.0
    %153 = vmatpush.msra.mxu0 0.0
    %154 = vmatpush.msra.mxu0 0.0
    %155 = vmatpush.msra.mxu0 %v138
    %156 = vmatmul.f32.gmra.mxu0 %v89
    %v157 = vpop.f32.mrf.mxu0
    %v158 = vadd.f32 %v85, %v157
    %159 = vmatmul.f32.gmra.mxu0 %v92
    %v160 = vpop.f32.mrf.mxu0
    %v161 = vadd.f32 %v85, %v160
    %162 = vmatmul.f32.gmra.mxu0 %v95
    %v163 = vpop.f32.mrf.mxu0
    %v164 = vadd.f32 %v85, %v163
    %165 = vmatmul.f32.gmra.mxu0 %v98
    %v166 = vpop.f32.mrf.mxu0
    %v167 = vadd.f32 %v85, %v166
    %168 = vmatmul.f32.gmra.mxu0 %v101
    %v169 = vpop.f32.mrf.mxu0
    %v170 = vadd.f32 %v85, %v169
    %171 = vmatmul.f32.gmra.mxu0 %v104
    %v172 = vpop.f32.mrf.mxu0
    %v173 = vadd.f32 %v85, %v172
    %174 = vmatmul.f32.gmra.mxu0 %v107
    %v175 = vpop.f32.mrf.mxu0
    %v176 = vadd.f32 %v85, %v175
    %177 = vmatmul.f32.gmra.mxu0 %v110
    %v178 = vpop.f32.mrf.mxu0
    %v179 = vadd.f32 %v85, %v178
    %180 = vmatmul.f32.gmra.mxu0 %v113
    %v181 = vpop.f32.mrf.mxu0
    %v182 = vadd.f32 %v85, %v181
    %183 = vmatmul.f32.gmra.mxu0 %v116
    %v184 = vpop.f32.mrf.mxu0
    %v185 = vadd.f32 %v85, %v184
    %186 = vmatmul.f32.gmra.mxu0 %v119
    %v187 = vpop.f32.mrf.mxu0
    %v188 = vadd.f32 %v85, %v187
    %189 = vmatmul.f32.gmra.mxu0 %v122
    %v190 = vpop.f32.mrf.mxu0
    %v191 = vadd.f32 %v85, %v190
    %192 = vmatmul.f32.gmra.mxu0 %v125
    %v193 = vpop.f32.mrf.mxu0
    %v194 = vadd.f32 %v85, %v193
    %195 = vmatmul.f32.gmra.mxu0 %v128
    %v196 = vpop.f32.mrf.mxu0
    %v197 = vadd.f32 %v85, %v196
    %198 = vmatmul.f32.gmra.mxu0 %v131
    %v199 = vpop.f32.mrf.mxu0
    %v200 = vadd.f32 %v85, %v199
    %201 = vmatmul.f32.gmra.mxu0 %v134
    %v202 = vpop.f32.mrf.mxu0
    %v203 = vadd.f32 %v85, %v202
    %204 = vdwg.mxu0
    %v205 = vmax.f32 %v158, 0.0
    %v206 = vmax.f32 %v161, 0.0
    %v207 = vmax.f32 %v164, 0.0
    %v208 = vmax.f32 %v167, 0.0
    %v209 = vmax.f32 %v170, 0.0
    %v210 = vmax.f32 %v173, 0.0
    %v211 = vmax.f32 %v176, 0.0
    %v212 = vmax.f32 %v179, 0.0
    %v213 = vmax.f32 %v182, 0.0
    %v214 = vmax.f32 %v185, 0.0
    %v215 = vmax.f32 %v188, 0.0
    %v216 = vmax.f32 %v191, 0.0
    %v217 = vmax.f32 %v194, 0.0
    %v218 = vmax.f32 %v197, 0.0
    %v219 = vmax.f32 %v200, 0.0
    %v220 = vmax.f32 %v203, 0.0
    %v221 = vld [vmem:[%s3] sm:$0xff]
    %v222 = vld [vmem:[%s4] sm:$0x1]
    %v224 = vperm.slane %v222, 0
    %vm226 = vcmask 64512
    %v228 = vsel %vm226, %v205, 0
    %v231 = vsel %vm226, %v206, 0
    %v234 = vsel %vm226, %v207, 0
    %v237 = vsel %vm226, %v208, 0
    %v240 = vsel %vm226, %v209, 0
    %v243 = vsel %vm226, %v210, 0
    %v246 = vsel %vm226, %v211, 0
    %v249 = vsel %vm226, %v212, 0
    %v252 = vsel %vm226, %v213, 0
    %v255 = vsel %vm226, %v214, 0
    %v258 = vsel %vm226, %v215, 0
    %v261 = vsel %vm226, %v216, 0
    %v264 = vsel %vm226, %v217, 0
    %v267 = vsel %vm226, %v218, 0
    %v270 = vsel %vm226, %v219, 0
    %v273 = vsel %vm226, %v220, 0
    %275 = vmatpush.msra.mxu0 0.0
    %276 = vmatpush.msra.mxu0 0.0
    %277 = vmatpush.msra.mxu0 0.0
    %278 = vmatpush.msra.mxu0 0.0
    %279 = vmatpush.msra.mxu0 0.0
    %280 = vmatpush.msra.mxu0 0.0
    %281 = vmatpush.msra.mxu0 0.0
    %282 = vmatpush.msra.mxu0 0.0
    %283 = vmatpush.msra.mxu0 0.0
    %284 = vmatpush.msra.mxu0 0.0
    %285 = vmatpush.msra.mxu0 0.0
    %286 = vmatpush.msra.mxu0 0.0
    %287 = vmatpush.msra.mxu0 0.0
    %288 = vmatpush.msra.mxu0 0.0
    %289 = vmatpush.msra.mxu0 0.0
    %290 = vmatpush.msra.mxu0 %v221
    %291 = vmatmul.f32.gmra.mxu0 %v228
    %v292 = vpop.f32.mrf.mxu0
    %v293 = vadd.f32 %v224, %v292
    %294 = vmatmul.f32.gmra.mxu0 %v231
    %v295 = vpop.f32.mrf.mxu0
    %v296 = vadd.f32 %v224, %v295
    %297 = vmatmul.f32.gmra.mxu0 %v234
    %v298 = vpop.f32.mrf.mxu0
    %v299 = vadd.f32 %v224, %v298
    %300 = vmatmul.f32.gmra.mxu0 %v237
    %v301 = vpop.f32.mrf.mxu0
    %v302 = vadd.f32 %v224, %v301
    %303 = vmatmul.f32.gmra.mxu0 %v240
    %v304 = vpop.f32.mrf.mxu0
    %v305 = vadd.f32 %v224, %v304
    %306 = vmatmul.f32.gmra.mxu0 %v243
    %v307 = vpop.f32.mrf.mxu0
    %v308 = vadd.f32 %v224, %v307
    %309 = vmatmul.f32.gmra.mxu0 %v246
    %v310 = vpop.f32.mrf.mxu0
    %v311 = vadd.f32 %v224, %v310
    %312 = vmatmul.f32.gmra.mxu0 %v249
    %v313 = vpop.f32.mrf.mxu0
    %v314 = vadd.f32 %v224, %v313
    %315 = vmatmul.f32.gmra.mxu0 %v252
    %v316 = vpop.f32.mrf.mxu0
    %v317 = vadd.f32 %v224, %v316
    %318 = vmatmul.f32.gmra.mxu0 %v255
    %v319 = vpop.f32.mrf.mxu0
    %v320 = vadd.f32 %v224, %v319
    %321 = vmatmul.f32.gmra.mxu0 %v258
    %v322 = vpop.f32.mrf.mxu0
    %v323 = vadd.f32 %v224, %v322
    %324 = vmatmul.f32.gmra.mxu0 %v261
    %v325 = vpop.f32.mrf.mxu0
    %v326 = vadd.f32 %v224, %v325
    %327 = vmatmul.f32.gmra.mxu0 %v264
    %v328 = vpop.f32.mrf.mxu0
    %v329 = vadd.f32 %v224, %v328
    %330 = vmatmul.f32.gmra.mxu0 %v267
    %v331 = vpop.f32.mrf.mxu0
    %v332 = vadd.f32 %v224, %v331
    %333 = vmatmul.f32.gmra.mxu0 %v270
    %v334 = vpop.f32.mrf.mxu0
    %v335 = vadd.f32 %v224, %v334
    %336 = vmatmul.f32.gmra.mxu0 %v273
    %v337 = vpop.f32.mrf.mxu0
    %v338 = vadd.f32 %v224, %v337
    %339 = vdwg.mxu0
    %vm340 = vcmask 523264
    %v341 = vsel %vm340, %v293, -inf
    %v342 = vsel %vm340, %v296, -inf
    %v343 = vmax.f32 %v341, %v342
    %v344 = vrot.slane %v343, 4
    %v345 = vmax.f32 %v343, %v344
    %v346 = vrot.slane %v345, 2
    %v347 = vmax.f32 %v345, %v346
    %v348 = vrot.slane %v347, 1
    %v349 = vmax.f32 %v347, %v348
    %v350 = vsel %vm340, %v299, -inf
    %v351 = vsel %vm340, %v302, -inf
    %v352 = vmax.f32 %v350, %v351
    %v353 = vrot.slane %v352, 4
    %v354 = vmax.f32 %v352, %v353
    %v355 = vrot.slane %v354, 2
    %v356 = vmax.f32 %v354, %v355
    %v357 = vrot.slane %v356, 1
    %v358 = vmax.f32 %v356, %v357
    %v359 = vsel %vm340, %v305, -inf
    %v360 = vsel %vm340, %v308, -inf
    %v361 = vmax.f32 %v359, %v360
    %v362 = vrot.slane %v361, 4
    %v363 = vmax.f32 %v361, %v362
    %v364 = vrot.slane %v363, 2
    %v365 = vmax.f32 %v363, %v364
    %v366 = vrot.slane %v365, 1
    %v367 = vmax.f32 %v365, %v366
    %v368 = vsel %vm340, %v311, -inf
    %v369 = vsel %vm340, %v314, -inf
    %v370 = vmax.f32 %v368, %v369
    %v371 = vrot.slane %v370, 4
    %v372 = vmax.f32 %v370, %v371
    %v373 = vrot.slane %v372, 2
    %v374 = vmax.f32 %v372, %v373
    %v375 = vrot.slane %v374, 1
    %v376 = vmax.f32 %v374, %v375
    %v377 = vsel %vm340, %v317, -inf
    %v378 = vsel %vm340, %v320, -inf
    %v379 = vmax.f32 %v377, %v378
    %v380 = vrot.slane %v379, 4
    %v381 = vmax.f32 %v379, %v380
    %v382 = vrot.slane %v381, 2
    %v383 = vmax.f32 %v381, %v382
    %v384 = vrot.slane %v383, 1
    %v385 = vmax.f32 %v383, %v384
    %v386 = vsel %vm340, %v323, -inf
    %v387 = vsel %vm340, %v326, -inf
    %v388 = vmax.f32 %v386, %v387
    %v389 = vrot.slane %v388, 4
    %v390 = vmax.f32 %v388, %v389
    %v391 = vrot.slane %v390, 2
    %v392 = vmax.f32 %v390, %v391
    %v393 = vrot.slane %v392, 1
    %v394 = vmax.f32 %v392, %v393
    %v395 = vsel %vm340, %v329, -inf
    %v396 = vsel %vm340, %v332, -inf
    %v397 = vmax.f32 %v395, %v396
    %v398 = vrot.slane %v397, 4
    %v399 = vmax.f32 %v397, %v398
    %v400 = vrot.slane %v399, 2
    %v401 = vmax.f32 %v399, %v400
    %v402 = vrot.slane %v401, 1
    %v403 = vmax.f32 %v401, %v402
    %v404 = vsel %vm340, %v335, -inf
    %v405 = vsel %vm340, %v338, -inf
    %v406 = vmax.f32 %v404, %v405
    %v407 = vrot.slane %v406, 4
    %v408 = vmax.f32 %v406, %v407
    %v409 = vrot.slane %v408, 2
    %v410 = vmax.f32 %v408, %v409
    %v411 = vrot.slane %v410, 1
    %v412 = vmax.f32 %v410, %v411
    %v413 = vld [vmem:[%s5] sm:$0xff]
    %v414 = vld [vmem:[%s5 + $0x8] sm:$0xff]
    %v415 = vld [vmem:[%s5 + $0x10] sm:$0xff]
    %v416 = vld [vmem:[%s5 + $0x18] sm:$0xff]
    %v417 = vld [vmem:[%s5 + $0x20] sm:$0xff]
    %v418 = vld [vmem:[%s5 + $0x28] sm:$0xff]
    %v419 = vld [vmem:[%s5 + $0x30] sm:$0xff]
    %v420 = vld [vmem:[%s5 + $0x38] sm:$0xff]
    %v421 = vld [vmem:[%s6] sm:$0x1]
    %v423 = vperm.slane %v421, 0
    %vm433 = vcmask 1041409
    %v434 = vsel %vm433, %v358, %v349
    %vm435 = vcmask 1042434
    %v436 = vsel %vm435, %v367, %v434
    %vm437 = vcmask 1043459
    %v438 = vsel %vm437, %v376, %v436
    %vm439 = vcmask 1044484
    %v440 = vsel %vm439, %v385, %v438
    %vm441 = vcmask 1045509
    %v442 = vsel %vm441, %v394, %v440
    %vm443 = vcmask 1046534
    %v444 = vsel %vm443, %v403, %v442
    %vm445 = vcmask 1047559
    %v446 = vsel %vm445, %v412, %v444
    %v447 = vsel %vm340, %v446, 0
    %449 = vmatpush.msra.mxu0 0.0
    %450 = vmatpush.msra.mxu0 0.0
    %451 = vmatpush.msra.mxu0 0.0
    %452 = vmatpush.msra.mxu0 0.0
    %453 = vmatpush.msra.mxu0 0.0
    %454 = vmatpush.msra.mxu0 0.0
    %455 = vmatpush.msra.mxu0 0.0
    %456 = vmatpush.msra.mxu0 0.0
    %457 = vmatpush.msra.mxu0 %v420
    %458 = vmatpush.msra.mxu0 %v419
    %459 = vmatpush.msra.mxu0 %v418
    %460 = vmatpush.msra.mxu0 %v417
    %461 = vmatpush.msra.mxu0 %v416
    %462 = vmatpush.msra.mxu0 %v415
    %463 = vmatpush.msra.mxu0 %v414
    %464 = vmatpush.msra.mxu0 %v413
    %465 = vmatmul.f32.gmra.mxu0 %v447
    %v466 = vpop.f32.mrf.mxu0
    %v467 = vadd.f32 %v423, %v466
    %468 = vdwg.mxu0
    %v469 = vmax.f32 %v467, 0.0
    %v470 = vld [vmem:[%s7] sm:$0xff]
    %v471 = vld [vmem:[%s7 + $0x8] sm:$0xff]
    %v472 = vld [vmem:[%s7 + $0x10] sm:$0xff]
    %v473 = vld [vmem:[%s7 + $0x18] sm:$0xff]
    %v474 = vld [vmem:[%s8] sm:$0x1]
    %v476 = vperm.slane %v474, 0
    %vm478 = vcmask 261120
    %v480 = vsel %vm478, %v469, 0
    %482 = vmatpush.msra.mxu0 0.0
    %483 = vmatpush.msra.mxu0 0.0
    %484 = vmatpush.msra.mxu0 0.0
    %485 = vmatpush.msra.mxu0 0.0
    %486 = vmatpush.msra.mxu0 0.0
    %487 = vmatpush.msra.mxu0 0.0
    %488 = vmatpush.msra.mxu0 0.0
    %489 = vmatpush.msra.mxu0 0.0
    %490 = vmatpush.msra.mxu0 0.0
    %491 = vmatpush.msra.mxu0 0.0
    %492 = vmatpush.msra.mxu0 0.0
    %493 = vmatpush.msra.mxu0 0.0
    %494 = vmatpush.msra.mxu0 %v473
    %495 = vmatpush.msra.mxu0 %v472
    %496 = vmatpush.msra.mxu0 %v471
    %497 = vmatpush.msra.mxu0 %v470
    %498 = vmatmul.f32.gmra.mxu0 %v480
    %v499 = vpop.f32.mrf.mxu0
    %v500 = vadd.f32 %v476, %v499
    %501 = vdwg.mxu0
    %v502 = vmax.f32 %v500, 0.0
    %v503 = vld [vmem:[%s9] sm:$0xff]
    %v504 = vld [vmem:[%s9 + $0x8] sm:$0xff]
    %v505 = vld [vmem:[%s10] sm:$0x1]
    %v507 = vperm.slane %v505, 0
    %vm509 = vcmask 130048
    %v511 = vsel %vm509, %v502, 0
    %513 = vmatpush.msra.mxu0 0.0
    %514 = vmatpush.msra.mxu0 0.0
    %515 = vmatpush.msra.mxu0 0.0
    %516 = vmatpush.msra.mxu0 0.0
    %517 = vmatpush.msra.mxu0 0.0
    %518 = vmatpush.msra.mxu0 0.0
    %519 = vmatpush.msra.mxu0 0.0
    %520 = vmatpush.msra.mxu0 0.0
    %521 = vmatpush.msra.mxu0 0.0
    %522 = vmatpush.msra.mxu0 0.0
    %523 = vmatpush.msra.mxu0 0.0
    %524 = vmatpush.msra.mxu0 0.0
    %525 = vmatpush.msra.mxu0 0.0
    %526 = vmatpush.msra.mxu0 0.0
    %527 = vmatpush.msra.mxu0 %v504
    %528 = vmatpush.msra.mxu0 %v503
    %529 = vmatmul.f32.gmra.mxu0 %v511
    %v530 = vpop.f32.mrf.mxu0
    %v531 = vadd.f32 %v507, %v530
    %532 = vdwg.mxu0
    %v533 = vmax.f32 %v531, 0.0
    %v534 = vld [vmem:[%s11] sm:$0xff]
    %v535 = vld [vmem:[%s11 + $0x8] sm:$0xff]
    %v536 = vld [vmem:[%s11 + $0x10] sm:$0xff]
    %v537 = vld [vmem:[%s11 + $0x18] sm:$0xff]
    %v538 = vld [vmem:[%s11 + $0x20] sm:$0xff]
    %v539 = vld [vmem:[%s11 + $0x28] sm:$0xff]
    %v540 = vld [vmem:[%s11 + $0x30] sm:$0xff]
    %v541 = vld [vmem:[%s11 + $0x38] sm:$0xff]
    %v542 = vld [vmem:[%s11 + $0x40] sm:$0xff]
    %v543 = vld [vmem:[%s11 + $0x48] sm:$0xff]
    %v544 = vld [vmem:[%s11 + $0x50] sm:$0xff]
    %v545 = vld [vmem:[%s11 + $0x58] sm:$0xff]
    %v546 = vld [vmem:[%s11 + $0x60] sm:$0xff]
    %v547 = vld [vmem:[%s11 + $0x68] sm:$0xff]
    %v548 = vld [vmem:[%s11 + $0x70] sm:$0xff]
    %v549 = vld [vmem:[%s11 + $0x78] sm:$0xff]
    %v550 = vld [vmem:[%s11 + $0x80] sm:$0xff]
    %v551 = vld [vmem:[%s11 + $0x88] sm:$0xff]
    %v552 = vld [vmem:[%s11 + $0x90] sm:$0xff]
    %v553 = vld [vmem:[%s11 + $0x98] sm:$0xff]
    %v554 = vld [vmem:[%s11 + $0xa0] sm:$0xff]
    %v555 = vld [vmem:[%s11 + $0xa8] sm:$0xff]
    %v556 = vld [vmem:[%s11 + $0xb0] sm:$0xff]
    %v557 = vld [vmem:[%s11 + $0xb8] sm:$0xff]
    %v558 = vld [vmem:[%s11 + $0xc0] sm:$0xff]
    %v559 = vld [vmem:[%s11 + $0xc8] sm:$0xff]
    %v560 = vld [vmem:[%s11 + $0xd0] sm:$0xff]
    %v561 = vld [vmem:[%s11 + $0xd8] sm:$0xff]
    %v562 = vld [vmem:[%s11 + $0xe0] sm:$0xff]
    %v563 = vld [vmem:[%s11 + $0xe8] sm:$0xff]
    %v564 = vld [vmem:[%s11 + $0xf0] sm:$0xff]
    %v565 = vld [vmem:[%s11 + $0xf8] sm:$0xff]
    %v566 = vld [vmem:[%s11 + $0x100] sm:$0x1]
    %v567 = vld [vmem:[%s11 + $0x108] sm:$0x1]
    %v568 = vld [vmem:[%s11 + $0x110] sm:$0x1]
    %v569 = vld [vmem:[%s11 + $0x118] sm:$0x1]
    %v570 = vld [vmem:[%s13] sm:$0xf]
    %v572 = vperm.slane %v570, 0
    %v573 = vperm.slane %v570, 1
    %v574 = vperm.slane %v570, 2
    %v575 = vperm.slane %v570, 3
    %vm580 = vcmask 531456
    %v582 = vsel %vm580, %v533, 0
    %vm584 = vcmask 1040384
    %v586 = vsel %vm584, %v566, 0
    %v589 = vsel %vm584, %v567, 0
    %v592 = vsel %vm584, %v568, 0
    %v595 = vsel %vm584, %v569, 0
    %597 = vmatpush.msra.mxu0 0.0
    %598 = vmatpush.msra.mxu0 0.0
    %599 = vmatpush.msra.mxu0 0.0
    %600 = vmatpush.msra.mxu0 0.0
    %601 = vmatpush.msra.mxu0 0.0
    %602 = vmatpush.msra.mxu0 0.0
    %603 = vmatpush.msra.mxu0 0.0
    %604 = vmatpush.msra.mxu0 %v586
    %605 = vmatpush.msra.mxu0 %v562
    %606 = vmatpush.msra.mxu0 %v558
    %607 = vmatpush.msra.mxu0 %v554
    %608 = vmatpush.msra.mxu0 %v550
    %609 = vmatpush.msra.mxu0 %v546
    %610 = vmatpush.msra.mxu0 %v542
    %611 = vmatpush.msra.mxu0 %v538
    %612 = vmatpush.msra.mxu0 %v534
    %613 = vmatmul.f32.gmra.mxu0 %v582
    %v614 = vpop.f32.mrf.mxu0
    %v615 = vadd.f32 %v572, %v614
    %616 = vdwg.mxu0
    %617 = vmatpush.msra.mxu0 0.0
    %618 = vmatpush.msra.mxu0 0.0
    %619 = vmatpush.msra.mxu0 0.0
    %620 = vmatpush.msra.mxu0 0.0
    %621 = vmatpush.msra.mxu0 0.0
    %622 = vmatpush.msra.mxu0 0.0
    %623 = vmatpush.msra.mxu0 0.0
    %624 = vmatpush.msra.mxu0 %v589
    %625 = vmatpush.msra.mxu0 %v563
    %626 = vmatpush.msra.mxu0 %v559
    %627 = vmatpush.msra.mxu0 %v555
    %628 = vmatpush.msra.mxu0 %v551
    %629 = vmatpush.msra.mxu0 %v547
    %630 = vmatpush.msra.mxu0 %v543
    %631 = vmatpush.msra.mxu0 %v539
    %632 = vmatpush.msra.mxu0 %v535
    %633 = vmatmul.f32.gmra.mxu0 %v582
    %v634 = vpop.f32.mrf.mxu0
    %v635 = vadd.f32 %v573, %v634
    %636 = vdwg.mxu0
    %637 = vmatpush.msra.mxu0 0.0
    %638 = vmatpush.msra.mxu0 0.0
    %639 = vmatpush.msra.mxu0 0.0
    %640 = vmatpush.msra.mxu0 0.0
    %641 = vmatpush.msra.mxu0 0.0
    %642 = vmatpush.msra.mxu0 0.0
    %643 = vmatpush.msra.mxu0 0.0
    %644 = vmatpush.msra.mxu0 %v592
    %645 = vmatpush.msra.mxu0 %v564
    %646 = vmatpush.msra.mxu0 %v560
    %647 = vmatpush.msra.mxu0 %v556
    %648 = vmatpush.msra.mxu0 %v552
    %649 = vmatpush.msra.mxu0 %v548
    %650 = vmatpush.msra.mxu0 %v544
    %651 = vmatpush.msra.mxu0 %v540
    %652 = vmatpush.msra.mxu0 %v536
    %653 = vmatmul.f32.gmra.mxu0 %v582
    %v654 = vpop.f32.mrf.mxu0
    %v655 = vadd.f32 %v574, %v654
    %656 = vdwg.mxu0
    %657 = vmatpush.msra.mxu0 0.0
    %658 = vmatpush.msra.mxu0 0.0
    %659 = vmatpush.msra.mxu0 0.0
    %660 = vmatpush.msra.mxu0 0.0
    %661 = vmatpush.msra.mxu0 0.0
    %662 = vmatpush.msra.mxu0 0.0
    %663 = vmatpush.msra.mxu0 0.0
    %664 = vmatpush.msra.mxu0 %v595
    %665 = vmatpush.msra.mxu0 %v565
    %666 = vmatpush.msra.mxu0 %v561
    %667 = vmatpush.msra.mxu0 %v557
    %668 = vmatpush.msra.mxu0 %v553
    %669 = vmatpush.msra.mxu0 %v549
    %670 = vmatpush.msra.mxu0 %v545
    %671 = vmatpush.msra.mxu0 %v541
    %672 = vmatpush.msra.mxu0 %v537
    %673 = vmatmul.f32.gmra.mxu0 %v582
    %v674 = vpop.f32.mrf.mxu0
    %v675 = vadd.f32 %v575, %v674
    %676 = vdwg.mxu0
    %v677 = vld [vmem:[%s12] sm:$0xff]
    %v678 = vld [vmem:[%s12 + $0x8] sm:$0xff]
    %v679 = vld [vmem:[%s12 + $0x10] sm:$0xff]
    %v680 = vld [vmem:[%s12 + $0x18] sm:$0xff]
    %v681 = vld [vmem:[%s12 + $0x20] sm:$0xff]
    %v682 = vld [vmem:[%s12 + $0x28] sm:$0xff]
    %v683 = vld [vmem:[%s12 + $0x30] sm:$0xff]
    %v684 = vld [vmem:[%s12 + $0x38] sm:$0xff]
    %v685 = vld [vmem:[%s12 + $0x40] sm:$0xff]
    %v686 = vld [vmem:[%s12 + $0x48] sm:$0xff]
    %v687 = vld [vmem:[%s12 + $0x50] sm:$0xff]
    %v688 = vld [vmem:[%s12 + $0x58] sm:$0xff]
    %v689 = vld [vmem:[%s12 + $0x60] sm:$0xff]
    %v690 = vld [vmem:[%s12 + $0x68] sm:$0xff]
    %v691 = vld [vmem:[%s12 + $0x70] sm:$0xff]
    %v692 = vld [vmem:[%s12 + $0x78] sm:$0xff]
    %v693 = vld [vmem:[%s12 + $0x80] sm:$0xff]
    %v694 = vld [vmem:[%s12 + $0x88] sm:$0xff]
    %v695 = vld [vmem:[%s12 + $0x90] sm:$0xff]
    %v696 = vld [vmem:[%s12 + $0x98] sm:$0xff]
    %v697 = vld [vmem:[%s12 + $0xa0] sm:$0xff]
    %v698 = vld [vmem:[%s12 + $0xa8] sm:$0xff]
    %v699 = vld [vmem:[%s12 + $0xb0] sm:$0xff]
    %v700 = vld [vmem:[%s12 + $0xb8] sm:$0xff]
    %v701 = vld [vmem:[%s12 + $0xc0] sm:$0xff]
    %v702 = vld [vmem:[%s12 + $0xc8] sm:$0xff]
    %v703 = vld [vmem:[%s12 + $0xd0] sm:$0xff]
    %v704 = vld [vmem:[%s12 + $0xd8] sm:$0xff]
    %v705 = vld [vmem:[%s12 + $0xe0] sm:$0xff]
    %v706 = vld [vmem:[%s12 + $0xe8] sm:$0xff]
    %v707 = vld [vmem:[%s12 + $0xf0] sm:$0xff]
    %v708 = vld [vmem:[%s12 + $0xf8] sm:$0xff]
    %v709 = vld [vmem:[%s12 + $0x100] sm:$0xff]
    %v710 = vld [vmem:[%s12 + $0x108] sm:$0xff]
    %v711 = vld [vmem:[%s12 + $0x110] sm:$0xff]
    %v712 = vld [vmem:[%s12 + $0x118] sm:$0xff]
    %v713 = vld [vmem:[%s12 + $0x120] sm:$0xff]
    %v714 = vld [vmem:[%s12 + $0x128] sm:$0xff]
    %v715 = vld [vmem:[%s12 + $0x130] sm:$0xff]
    %v716 = vld [vmem:[%s12 + $0x138] sm:$0xff]
    %v717 = vld [vmem:[%s12 + $0x140] sm:$0xff]
    %v718 = vld [vmem:[%s12 + $0x148] sm:$0xff]
    %v719 = vld [vmem:[%s12 + $0x150] sm:$0xff]
    %v720 = vld [vmem:[%s12 + $0x158] sm:$0xff]
    %v721 = vld [vmem:[%s12 + $0x160] sm:$0xff]
    %v722 = vld [vmem:[%s12 + $0x168] sm:$0xff]
    %v723 = vld [vmem:[%s12 + $0x170] sm:$0xff]
    %v724 = vld [vmem:[%s12 + $0x178] sm:$0xff]
    %v725 = vld [vmem:[%s12 + $0x180] sm:$0xff]
    %v726 = vld [vmem:[%s12 + $0x188] sm:$0xff]
    %v727 = vld [vmem:[%s12 + $0x190] sm:$0xff]
    %v728 = vld [vmem:[%s12 + $0x198] sm:$0xff]
    %v729 = vld [vmem:[%s12 + $0x1a0] sm:$0xff]
    %v730 = vld [vmem:[%s12 + $0x1a8] sm:$0xff]
    %v731 = vld [vmem:[%s12 + $0x1b0] sm:$0xff]
    %v732 = vld [vmem:[%s12 + $0x1b8] sm:$0xff]
    %v733 = vld [vmem:[%s12 + $0x1c0] sm:$0xff]
    %v734 = vld [vmem:[%s12 + $0x1c8] sm:$0xff]
    %v735 = vld [vmem:[%s12 + $0x1d0] sm:$0xff]
    %v736 = vld [vmem:[%s12 + $0x1d8] sm:$0xff]
    %v737 = vld [vmem:[%s12 + $0x1e0] sm:$0xff]
    %v738 = vld [vmem:[%s12 + $0x1e8] sm:$0xff]
    %v739 = vld [vmem:[%s12 + $0x1f0] sm:$0xff]
    %v740 = vld [vmem:[%s12 + $0x1f8] sm:$0xff]
    %v741 = vld [vmem:[%s14] sm:$0xff]
    %v742 = vld [vmem:[%s14 + $0x8] sm:$0xff]
    %v743 = vld [vmem:[%s14 + $0x10] sm:$0xff]
    %v744 = vld [vmem:[%s14 + $0x18] sm:$0xff]
    %v745 = vld [vmem:[%s14 + $0x20] sm:$0xff]
    %v746 = vld [vmem:[%s14 + $0x28] sm:$0xff]
    %v747 = vld [vmem:[%s14 + $0x30] sm:$0xff]
    %v748 = vld [vmem:[%s14 + $0x38] sm:$0xff]
    %v749 = vld [vmem:[%s14 + $0x40] sm:$0xff]
    %v750 = vld [vmem:[%s14 + $0x48] sm:$0xff]
    %v751 = vld [vmem:[%s14 + $0x50] sm:$0xff]
    %v752 = vld [vmem:[%s14 + $0x58] sm:$0xff]
    %v753 = vld [vmem:[%s14 + $0x60] sm:$0xff]
    %v754 = vld [vmem:[%s14 + $0x68] sm:$0xff]
    %v755 = vld [vmem:[%s14 + $0x70] sm:$0xff]
    %v756 = vld [vmem:[%s14 + $0x78] sm:$0xff]
    %v757 = vld [vmem:[%s14 + $0x80] sm:$0xff]
    %v758 = vld [vmem:[%s14 + $0x88] sm:$0xff]
    %v759 = vld [vmem:[%s14 + $0x90] sm:$0xff]
    %v760 = vld [vmem:[%s14 + $0x98] sm:$0xff]
    %v761 = vld [vmem:[%s14 + $0xa0] sm:$0xff]
    %v762 = vld [vmem:[%s14 + $0xa8] sm:$0xff]
    %v763 = vld [vmem:[%s14 + $0xb0] sm:$0xff]
    %v764 = vld [vmem:[%s14 + $0xb8] sm:$0xff]
    %v765 = vld [vmem:[%s14 + $0xc0] sm:$0xff]
    %v766 = vld [vmem:[%s14 + $0xc8] sm:$0xff]
    %v767 = vld [vmem:[%s14 + $0xd0] sm:$0xff]
    %v768 = vld [vmem:[%s14 + $0xd8] sm:$0xff]
    %v769 = vld [vmem:[%s14 + $0xe0] sm:$0xff]
    %v770 = vld [vmem:[%s14 + $0xe8] sm:$0xff]
    %v771 = vld [vmem:[%s14 + $0xf0] sm:$0xff]
    %v772 = vld [vmem:[%s14 + $0xf8] sm:$0xff]
    %v773 = vld [vmem:[%s14 + $0x100] sm:$0xff]
    %v774 = vld [vmem:[%s14 + $0x108] sm:$0xff]
    %v775 = vld [vmem:[%s14 + $0x110] sm:$0xff]
    %v776 = vld [vmem:[%s14 + $0x118] sm:$0xff]
    %v777 = vld [vmem:[%s14 + $0x120] sm:$0xff]
    %v778 = vld [vmem:[%s14 + $0x128] sm:$0xff]
    %v779 = vld [vmem:[%s14 + $0x130] sm:$0xff]
    %v780 = vld [vmem:[%s14 + $0x138] sm:$0xff]
    %v781 = vld [vmem:[%s14 + $0x140] sm:$0xff]
    %v782 = vld [vmem:[%s14 + $0x148] sm:$0xff]
    %v783 = vld [vmem:[%s14 + $0x150] sm:$0xff]
    %v784 = vld [vmem:[%s14 + $0x158] sm:$0xff]
    %v785 = vld [vmem:[%s14 + $0x160] sm:$0xff]
    %v786 = vld [vmem:[%s14 + $0x168] sm:$0xff]
    %v787 = vld [vmem:[%s14 + $0x170] sm:$0xff]
    %v788 = vld [vmem:[%s14 + $0x178] sm:$0xff]
    %v789 = vld [vmem:[%s14 + $0x180] sm:$0xff]
    %v790 = vld [vmem:[%s14 + $0x188] sm:$0xff]
    %v791 = vld [vmem:[%s14 + $0x190] sm:$0xff]
    %v792 = vld [vmem:[%s14 + $0x198] sm:$0xff]
    %v793 = vld [vmem:[%s14 + $0x1a0] sm:$0xff]
    %v794 = vld [vmem:[%s14 + $0x1a8] sm:$0xff]
    %v795 = vld [vmem:[%s14 + $0x1b0] sm:$0xff]
    %v796 = vld [vmem:[%s14 + $0x1b8] sm:$0xff]
    %v797 = vld [vmem:[%s14 + $0x1c0] sm:$0xff]
    %v798 = vld [vmem:[%s14 + $0x1c8] sm:$0xff]
    %v799 = vld [vmem:[%s14 + $0x1d0] sm:$0xff]
    %v800 = vld [vmem:[%s14 + $0x1d8] sm:$0xff]
    %v801 = vld [vmem:[%s14 + $0x1e0] sm:$0xff]
    %v802 = vld [vmem:[%s14 + $0x1e8] sm:$0xff]
    %v803 = vld [vmem:[%s14 + $0x1f0] sm:$0xff]
    %v804 = vld [vmem:[%s14 + $0x1f8] sm:$0xff]
    %v805 = vld [vmem:[%s14 + $0x200] sm:$0xff]
    %v806 = vld [vmem:[%s14 + $0x208] sm:$0xff]
    %v807 = vld [vmem:[%s14 + $0x210] sm:$0xff]
    %v808 = vld [vmem:[%s14 + $0x218] sm:$0xff]
    %v809 = vld [vmem:[%s14 + $0x220] sm:$0xff]
    %v810 = vld [vmem:[%s14 + $0x228] sm:$0xff]
    %v811 = vld [vmem:[%s14 + $0x230] sm:$0xff]
    %v812 = vld [vmem:[%s14 + $0x238] sm:$0xff]
    %v813 = vld [vmem:[%s14 + $0x240] sm:$0xff]
    %v814 = vld [vmem:[%s14 + $0x248] sm:$0xff]
    %v815 = vld [vmem:[%s14 + $0x250] sm:$0xff]
    %v816 = vld [vmem:[%s14 + $0x258] sm:$0xff]
    %v817 = vld [vmem:[%s14 + $0x260] sm:$0xff]
    %v818 = vld [vmem:[%s14 + $0x268] sm:$0xff]
    %v819 = vld [vmem:[%s14 + $0x270] sm:$0xff]
    %v820 = vld [vmem:[%s14 + $0x278] sm:$0xff]
    %v821 = vld [vmem:[%s14 + $0x280] sm:$0xff]
    %v822 = vld [vmem:[%s14 + $0x288] sm:$0xff]
    %v823 = vld [vmem:[%s14 + $0x290] sm:$0xff]
    %v824 = vld [vmem:[%s14 + $0x298] sm:$0xff]
    %v825 = vld [vmem:[%s14 + $0x2a0] sm:$0xff]
    %v826 = vld [vmem:[%s14 + $0x2a8] sm:$0xff]
    %v827 = vld [vmem:[%s14 + $0x2b0] sm:$0xff]
    %v828 = vld [vmem:[%s14 + $0x2b8] sm:$0xff]
    %v829 = vld [vmem:[%s14 + $0x2c0] sm:$0xff]
    %v830 = vld [vmem:[%s14 + $0x2c8] sm:$0xff]
    %v831 = vld [vmem:[%s14 + $0x2d0] sm:$0xff]
    %v832 = vld [vmem:[%s14 + $0x2d8] sm:$0xff]
    %v833 = vld [vmem:[%s14 + $0x2e0] sm:$0xff]
    %v834 = vld [vmem:[%s14 + $0x2e8] sm:$0xff]
    %v835 = vld [vmem:[%s14 + $0x2f0] sm:$0xff]
    %v836 = vld [vmem:[%s14 + $0x2f8] sm:$0xff]
    %v837 = vld [vmem:[%s14 + $0x300] sm:$0xff]
    %v838 = vld [vmem:[%s14 + $0x308] sm:$0xff]
    %v839 = vld [vmem:[%s14 + $0x310] sm:$0xff]
    %v840 = vld [vmem:[%s14 + $0x318] sm:$0xff]
    %v841 = vld [vmem:[%s14 + $0x320] sm:$0xff]
    %v842 = vld [vmem:[%s14 + $0x328] sm:$0xff]
    %v843 = vld [vmem:[%s14 + $0x330] sm:$0xff]
    %v844 = vld [vmem:[%s14 + $0x338] sm:$0xff]
    %v845 = vld [vmem:[%s14 + $0x340] sm:$0xff]
    %v846 = vld [vmem:[%s14 + $0x348] sm:$0xff]
    %v847 = vld [vmem:[%s14 + $0x350] sm:$0xff]
    %v848 = vld [vmem:[%s14 + $0x358] sm:$0xff]
    %v849 = vld [vmem:[%s14 + $0x360] sm:$0xff]
    %v850 = vld [vmem:[%s14 + $0x368] sm:$0xff]
    %v851 = vld [vmem:[%s14 + $0x370] sm:$0xff]
    %v852 = vld [vmem:[%s14 + $0x378] sm:$0xff]
    %v853 = vld [vmem:[%s14 + $0x380] sm:$0xff]
    %v854 = vld [vmem:[%s14 + $0x388] sm:$0xff]
    %v855 = vld [vmem:[%s14 + $0x390] sm:$0xff]
    %v856 = vld [vmem:[%s14 + $0x398] sm:$0xff]
    %v857 = vld [vmem:[%s14 + $0x3a0] sm:$0xff]
    %v858 = vld [vmem:[%s14 + $0x3a8] sm:$0xff]
    %v859 = vld [vmem:[%s14 + $0x3b0] sm:$0xff]
    %v860 = vld [vmem:[%s14 + $0x3b8] sm:$0xff]
    %v861 = vld [vmem:[%s14 + $0x3c0] sm:$0xff]
    %v862 = vld [vmem:[%s14 + $0x3c8] sm:$0xff]
    %v863 = vld [vmem:[%s14 + $0x3d0] sm:$0xff]
    %v864 = vld [vmem:[%s14 + $0x3d8] sm:$0xff]
    %v865 = vld [vmem:[%s14 + $0x3e0] sm:$0xff]
    %v866 = vld [vmem:[%s14 + $0x3e8] sm:$0xff]
    %v867 = vld [vmem:[%s14 + $0x3f0] sm:$0xff]
    %v868 = vld [vmem:[%s14 + $0x3f8] sm:$0xff]
    %v869 = vld [vmem:[%s15] sm:$0xf]
    %870 = vmatpush.msra.mxu0 %v737
    %871 = vmatpush.msra.mxu0 %v733
    %872 = vmatpush.msra.mxu0 %v729
    %873 = vmatpush.msra.mxu0 %v725
    %874 = vmatpush.msra.mxu0 %v721
    %875 = vmatpush.msra.mxu0 %v717
    %876 = vmatpush.msra.mxu0 %v713
    %877 = vmatpush.msra.mxu0 %v709
    %878 = vmatpush.msra.mxu0 %v705
    %879 = vmatpush.msra.mxu0 %v701
    %880 = vmatpush.msra.mxu0 %v697
    %881 = vmatpush.msra.mxu0 %v693
    %882 = vmatpush.msra.mxu0 %v689
    %883 = vmatpush.msra.mxu0 %v685
    %884 = vmatpush.msra.mxu0 %v681
    %885 = vmatpush.msra.mxu0 %v677
    %886 = vmatmul.f32.gmra.mxu0 0.0
    %v887 = vpop.f32.mrf.mxu0
    %v888 = vadd.f32 0.0, %v887
    %889 = vdwg.mxu0
    %890 = vmatpush.msra.mxu0 %v738
    %891 = vmatpush.msra.mxu0 %v734
    %892 = vmatpush.msra.mxu0 %v730
    %893 = vmatpush.msra.mxu0 %v726
    %894 = vmatpush.msra.mxu0 %v722
    %895 = vmatpush.msra.mxu0 %v718
    %896 = vmatpush.msra.mxu0 %v714
    %897 = vmatpush.msra.mxu0 %v710
    %898 = vmatpush.msra.mxu0 %v706
    %899 = vmatpush.msra.mxu0 %v702
    %900 = vmatpush.msra.mxu0 %v698
    %901 = vmatpush.msra.mxu0 %v694
    %902 = vmatpush.msra.mxu0 %v690
    %903 = vmatpush.msra.mxu0 %v686
    %904 = vmatpush.msra.mxu0 %v682
    %905 = vmatpush.msra.mxu0 %v678
    %906 = vmatmul.f32.gmra.mxu0 0.0
    %v907 = vpop.f32.mrf.mxu0
    %v908 = vadd.f32 0.0, %v907
    %909 = vdwg.mxu0
    %910 = vmatpush.msra.mxu0 %v739
    %911 = vmatpush.msra.mxu0 %v735
    %912 = vmatpush.msra.mxu0 %v731
    %913 = vmatpush.msra.mxu0 %v727
    %914 = vmatpush.msra.mxu0 %v723
    %915 = vmatpush.msra.mxu0 %v719
    %916 = vmatpush.msra.mxu0 %v715
    %917 = vmatpush.msra.mxu0 %v711
    %918 = vmatpush.msra.mxu0 %v707
    %919 = vmatpush.msra.mxu0 %v703
    %920 = vmatpush.msra.mxu0 %v699
    %921 = vmatpush.msra.mxu0 %v695
    %922 = vmatpush.msra.mxu0 %v691
    %923 = vmatpush.msra.mxu0 %v687
    %924 = vmatpush.msra.mxu0 %v683
    %925 = vmatpush.msra.mxu0 %v679
    %926 = vmatmul.f32.gmra.mxu0 0.0
    %v927 = vpop.f32.mrf.mxu0
    %v928 = vadd.f32 0.0, %v927
    %929 = vdwg.mxu0
    %930 = vmatpush.msra.mxu0 %v740
    %931 = vmatpush.msra.mxu0 %v736
    %932 = vmatpush.msra.mxu0 %v732
    %933 = vmatpush.msra.mxu0 %v728
    %934 = vmatpush.msra.mxu0 %v724
    %935 = vmatpush.msra.mxu0 %v720
    %936 = vmatpush.msra.mxu0 %v716
    %937 = vmatpush.msra.mxu0 %v712
    %938 = vmatpush.msra.mxu0 %v708
    %939 = vmatpush.msra.mxu0 %v704
    %940 = vmatpush.msra.mxu0 %v700
    %941 = vmatpush.msra.mxu0 %v696
    %942 = vmatpush.msra.mxu0 %v692
    %943 = vmatpush.msra.mxu0 %v688
    %944 = vmatpush.msra.mxu0 %v684
    %945 = vmatpush.msra.mxu0 %v680
    %946 = vmatmul.f32.gmra.mxu0 0.0
    %v947 = vpop.f32.mrf.mxu0
    %v948 = vadd.f32 0.0, %v947
    %949 = vdwg.mxu0
    %v950 = vadd.f32 %v615, %v888
    %v951 = vadd.f32 %v635, %v908
    %v952 = vadd.f32 %v655, %v928
    %v953 = vadd.f32 %v675, %v948
    %v954 = vxor.u32 %v950, 2147483648
    %v955 = vxor.u32 %v951, 2147483648
    %v956 = vxor.u32 %v952, 2147483648
    %v957 = vmul.f32 %v954, 1.442695
    %v958 = vpow.pop %v957
    %v959 = vmul.f32 %v955, 1.442695
    %v960 = vpow.pop %v959
    %v961 = vmul.f32 %v956, 1.442695
    %v962 = vpow.pop %v961
    %v963 = vadd.f32 %v958, 1.0
    %v964 = vadd.f32 %v960, 1.0
    %v965 = vadd.f32 %v962, 1.0
    %v966 = vrcp.pop %v963
    %v967 = vmul.f32 %v963, %v966
    %v968 = vsub.f32 1.0, %v967
    %v969 = vmul.f32 %v966, %v968
    %v970 = vadd.f32 %v966, %v969
    %vm971 = vweird.f32 %v963
    %vm972 = vweird.f32 %v966
    %vm973 = vmor %vm971, %vm972
    %v974 = vsel %vm973, %v966, %v970
    %v975 = vand.u32 2147483647, %v963
    %vm976 = vcmp.eq.f32.partialorder %v975, 8.507059e+37
    %v977 = vand.u32 %v963, 2147483648
    %v978 = vor.u32 1.1754944e-38, %v977
    %v979 = vsel %vm976, %v978, %v974
    %v980 = vmul.f32 1.0, %v979
    %v981 = vrcp.pop %v964
    %v982 = vmul.f32 %v964, %v981
    %v983 = vsub.f32 1.0, %v982
    %v984 = vmul.f32 %v981, %v983
    %v985 = vadd.f32 %v981, %v984
    %vm986 = vweird.f32 %v964
    %vm987 = vweird.f32 %v981
    %vm988 = vmor %vm986, %vm987
    %v989 = vsel %vm988, %v981, %v985
    %v990 = vand.u32 2147483647, %v964
    %vm991 = vcmp.eq.f32.partialorder %v990, 8.507059e+37
    %v992 = vand.u32 %v964, 2147483648
    %v993 = vor.u32 1.1754944e-38, %v992
    %v994 = vsel %vm991, %v993, %v989
    %v995 = vmul.f32 1.0, %v994
    %v996 = vrcp.pop %v965
    %v997 = vmul.f32 %v965, %v996
    %v998 = vsub.f32 1.0, %v997
    %v999 = vmul.f32 %v996, %v998
    %v1000 = vadd.f32 %v996, %v999
    %vm1001 = vweird.f32 %v965
    %vm1002 = vweird.f32 %v996
    %vm1003 = vmor %vm1001, %vm1002
    %v1004 = vsel %vm1003, %v996, %v1000
    %v1005 = vand.u32 2147483647, %v965
    %vm1006 = vcmp.eq.f32.partialorder %v1005, 8.507059e+37
    %v1007 = vand.u32 %v965, 2147483648
    %v1008 = vor.u32 1.1754944e-38, %v1007
    %v1009 = vsel %vm1006, %v1008, %v1004
    %v1010 = vmul.f32 1.0, %v1009
    %v1011 = vtanh.pop %v953
    %v1012 = vmul.f32 %v995, 0.0
    %v1013 = vmul.f32 %v980, %v1011
    %v1014 = vadd.f32 %v1012, %v1013
    %v1015 = vtanh.pop %v1014
    %v1016 = vmul.f32 %v1010, %v1015
    %v1018 = vperm.slane %v869, 0
    %v1019 = vperm.slane %v869, 1
    %v1020 = vperm.slane %v869, 2
    %v1021 = vperm.slane %v869, 3
    %1026 = vmatpush.msra.mxu0 %v801
    %1027 = vmatpush.msra.mxu0 %v797
    %1028 = vmatpush.msra.mxu0 %v793
    %1029 = vmatpush.msra.mxu0 %v789
    %1030 = vmatpush.msra.mxu0 %v785
    %1031 = vmatpush.msra.mxu0 %v781
    %1032 = vmatpush.msra.mxu0 %v777
    %1033 = vmatpush.msra.mxu0 %v773
    %1034 = vmatpush.msra.mxu0 %v769
    %1035 = vmatpush.msra.mxu0 %v765
    %1036 = vmatpush.msra.mxu0 %v761
    %1037 = vmatpush.msra.mxu0 %v757
    %1038 = vmatpush.msra.mxu0 %v753
    %1039 = vmatpush.msra.mxu0 %v749
    %1040 = vmatpush.msra.mxu0 %v745
    %1041 = vmatpush.msra.mxu0 %v741
    %1042 = vmatmul.f32.gmra.mxu0 %v1016
    %v1043 = vpop.f32.mrf.mxu0
    %v1044 = vadd.f32 %v1018, %v1043
    %1045 = vdwg.mxu0
    %1046 = vmatpush.msra.mxu0 %v865
    %1047 = vmatpush.msra.mxu0 %v861
    %1048 = vmatpush.msra.mxu0 %v857
    %1049 = vmatpush.msra.mxu0 %v853
    %1050 = vmatpush.msra.mxu0 %v849
    %1051 = vmatpush.msra.mxu0 %v845
    %1052 = vmatpush.msra.mxu0 %v841
    %1053 = vmatpush.msra.mxu0 %v837
    %1054 = vmatpush.msra.mxu0 %v833
    %1055 = vmatpush.msra.mxu0 %v829
    %1056 = vmatpush.msra.mxu0 %v825
    %1057 = vmatpush.msra.mxu0 %v821
    %1058 = vmatpush.msra.mxu0 %v817
    %1059 = vmatpush.msra.mxu0 %v813
    %1060 = vmatpush.msra.mxu0 %v809
    %1061 = vmatpush.msra.mxu0 %v805
    %1062 = vmatmul.f32.gmra.mxu0 0.0
    %v1063 = vpop.f32.mrf.mxu0
    %v1064 = vadd.f32 %v1044, %v1063
    %1065 = vdwg.mxu0
    %1066 = vmatpush.msra.mxu0 %v802
    %1067 = vmatpush.msra.mxu0 %v798
    %1068 = vmatpush.msra.mxu0 %v794
    %1069 = vmatpush.msra.mxu0 %v790
    %1070 = vmatpush.msra.mxu0 %v786
    %1071 = vmatpush.msra.mxu0 %v782
    %1072 = vmatpush.msra.mxu0 %v778
    %1073 = vmatpush.msra.mxu0 %v774
    %1074 = vmatpush.msra.mxu0 %v770
    %1075 = vmatpush.msra.mxu0 %v766
    %1076 = vmatpush.msra.mxu0 %v762
    %1077 = vmatpush.msra.mxu0 %v758
    %1078 = vmatpush.msra.mxu0 %v754
    %1079 = vmatpush.msra.mxu0 %v750
    %1080 = vmatpush.msra.mxu0 %v746
    %1081 = vmatpush.msra.mxu0 %v742
    %1082 = vmatmul.f32.gmra.mxu0 %v1016
    %v1083 = vpop.f32.mrf.mxu0
    %v1084 = vadd.f32 %v1019, %v1083
    %1085 = vdwg.mxu0
    %1086 = vmatpush.msra.mxu0 %v866
    %1087 = vmatpush.msra.mxu0 %v862
    %1088 = vmatpush.msra.mxu0 %v858
    %1089 = vmatpush.msra.mxu0 %v854
    %1090 = vmatpush.msra.mxu0 %v850
    %1091 = vmatpush.msra.mxu0 %v846
    %1092 = vmatpush.msra.mxu0 %v842
    %1093 = vmatpush.msra.mxu0 %v838
    %1094 = vmatpush.msra.mxu0 %v834
    %1095 = vmatpush.msra.mxu0 %v830
    %1096 = vmatpush.msra.mxu0 %v826
    %1097 = vmatpush.msra.mxu0 %v822
    %1098 = vmatpush.msra.mxu0 %v818
    %1099 = vmatpush.msra.mxu0 %v814
    %1100 = vmatpush.msra.mxu0 %v810
    %1101 = vmatpush.msra.mxu0 %v806
    %1102 = vmatmul.f32.gmra.mxu0 0.0
    %v1103 = vpop.f32.mrf.mxu0
    %v1104 = vadd.f32 %v1084, %v1103
    %1105 = vdwg.mxu0
    %1106 = vmatpush.msra.mxu0 %v803
    %1107 = vmatpush.msra.mxu0 %v799
    %1108 = vmatpush.msra.mxu0 %v795
    %1109 = vmatpush.msra.mxu0 %v791
    %1110 = vmatpush.msra.mxu0 %v787
    %1111 = vmatpush.msra.mxu0 %v783
    %1112 = vmatpush.msra.mxu0 %v779
    %1113 = vmatpush.msra.mxu0 %v775
    %1114 = vmatpush.msra.mxu0 %v771
    %1115 = vmatpush.msra.mxu0 %v767
    %1116 = vmatpush.msra.mxu0 %v763
    %1117 = vmatpush.msra.mxu0 %v759
    %1118 = vmatpush.msra.mxu0 %v755
    %1119 = vmatpush.msra.mxu0 %v751
    %1120 = vmatpush.msra.mxu0 %v747
    %1121 = vmatpush.msra.mxu0 %v743
    %1122 = vmatmul.f32.gmra.mxu0 %v1016
    %v1123 = vpop.f32.mrf.mxu0
    %v1124 = vadd.f32 %v1020, %v1123
    %1125 = vdwg.mxu0
    %1126 = vmatpush.msra.mxu0 %v867
    %1127 = vmatpush.msra.mxu0 %v863
    %1128 = vmatpush.msra.mxu0 %v859
    %1129 = vmatpush.msra.mxu0 %v855
    %1130 = vmatpush.msra.mxu0 %v851
    %1131 = vmatpush.msra.mxu0 %v847
    %1132 = vmatpush.msra.mxu0 %v843
    %1133 = vmatpush.msra.mxu0 %v839
    %1134 = vmatpush.msra.mxu0 %v835
    %1135 = vmatpush.msra.mxu0 %v831
    %1136 = vmatpush.msra.mxu0 %v827
    %1137 = vmatpush.msra.mxu0 %v823
    %1138 = vmatpush.msra.mxu0 %v819
    %1139 = vmatpush.msra.mxu0 %v815
    %1140 = vmatpush.msra.mxu0 %v811
    %1141 = vmatpush.msra.mxu0 %v807
    %1142 = vmatmul.f32.gmra.mxu0 0.0
    %v1143 = vpop.f32.mrf.mxu0
    %v1144 = vadd.f32 %v1124, %v1143
    %1145 = vdwg.mxu0
    %1146 = vmatpush.msra.mxu0 %v804
    %1147 = vmatpush.msra.mxu0 %v800
    %1148 = vmatpush.msra.mxu0 %v796
    %1149 = vmatpush.msra.mxu0 %v792
    %1150 = vmatpush.msra.mxu0 %v788
    %1151 = vmatpush.msra.mxu0 %v784
    %1152 = vmatpush.msra.mxu0 %v780
    %1153 = vmatpush.msra.mxu0 %v776
    %1154 = vmatpush.msra.mxu0 %v772
    %1155 = vmatpush.msra.mxu0 %v768
    %1156 = vmatpush.msra.mxu0 %v764
    %1157 = vmatpush.msra.mxu0 %v760
    %1158 = vmatpush.msra.mxu0 %v756
    %1159 = vmatpush.msra.mxu0 %v752
    %1160 = vmatpush.msra.mxu0 %v748
    %1161 = vmatpush.msra.mxu0 %v744
    %1162 = vmatmul.f32.gmra.mxu0 %v1016
    %v1163 = vpop.f32.mrf.mxu0
    %v1164 = vadd.f32 %v1021, %v1163
    %1165 = vdwg.mxu0
    %1166 = vmatpush.msra.mxu0 %v868
    %1167 = vmatpush.msra.mxu0 %v864
    %1168 = vmatpush.msra.mxu0 %v860
    %1169 = vmatpush.msra.mxu0 %v856
    %1170 = vmatpush.msra.mxu0 %v852
    %1171 = vmatpush.msra.mxu0 %v848
    %1172 = vmatpush.msra.mxu0 %v844
    %1173 = vmatpush.msra.mxu0 %v840
    %1174 = vmatpush.msra.mxu0 %v836
    %1175 = vmatpush.msra.mxu0 %v832
    %1176 = vmatpush.msra.mxu0 %v828
    %1177 = vmatpush.msra.mxu0 %v824
    %1178 = vmatpush.msra.mxu0 %v820
    %1179 = vmatpush.msra.mxu0 %v816
    %1180 = vmatpush.msra.mxu0 %v812
    %1181 = vmatpush.msra.mxu0 %v808
    %1182 = vmatmul.f32.gmra.mxu0 0.0
    %v1183 = vpop.f32.mrf.mxu0
    %v1184 = vadd.f32 %v1164, %v1183
    %1185 = vdwg.mxu0
    %v1186 = vxor.u32 %v1064, 2147483648
    %v1187 = vxor.u32 %v1104, 2147483648
    %v1188 = vxor.u32 %v1144, 2147483648
    %v1189 = vmul.f32 %v1186, 1.442695
    %v1190 = vpow.pop %v1189
    %v1191 = vmul.f32 %v1187, 1.442695
    %v1192 = vpow.pop %v1191
    %v1193 = vmul.f32 %v1188, 1.442695
    %v1194 = vpow.pop %v1193
    %v1195 = vadd.f32 %v1190, 1.0
    %v1196 = vadd.f32 %v1192, 1.0
    %v1197 = vadd.f32 %v1194, 1.0
    %v1198 = vrcp.pop %v1195
    %v1199 = vmul.f32 %v1195, %v1198
    %v1200 = vsub.f32 1.0, %v1199
    %v1201 = vmul.f32 %v1198, %v1200
    %v1202 = vadd.f32 %v1198, %v1201
    %vm1203 = vweird.f32 %v1195
    %vm1204 = vweird.f32 %v1198
    %vm1205 = vmor %vm1203, %vm1204
    %v1206 = vsel %vm1205, %v1198, %v1202
    %v1207 = vand.u32 2147483647, %v1195
    %vm1208 = vcmp.eq.f32.partialorder %v1207, 8.507059e+37
    %v1209 = vand.u32 %v1195, 2147483648
    %v1210 = vor.u32 1.1754944e-38, %v1209
    %v1211 = vsel %vm1208, %v1210, %v1206
    %v1212 = vmul.f32 1.0, %v1211
    %v1213 = vrcp.pop %v1196
    %v1214 = vmul.f32 %v1196, %v1213
    %v1215 = vsub.f32 1.0, %v1214
    %v1216 = vmul.f32 %v1213, %v1215
    %v1217 = vadd.f32 %v1213, %v1216
    %vm1218 = vweird.f32 %v1196
    %vm1219 = vweird.f32 %v1213
    %vm1220 = vmor %vm1218, %vm1219
    %v1221 = vsel %vm1220, %v1213, %v1217
    %v1222 = vand.u32 2147483647, %v1196
    %vm1223 = vcmp.eq.f32.partialorder %v1222, 8.507059e+37
    %v1224 = vand.u32 %v1196, 2147483648
    %v1225 = vor.u32 1.1754944e-38, %v1224
    %v1226 = vsel %vm1223, %v1225, %v1221
    %v1227 = vmul.f32 1.0, %v1226
    %v1228 = vrcp.pop %v1197
    %v1229 = vmul.f32 %v1197, %v1228
    %v1230 = vsub.f32 1.0, %v1229
    %v1231 = vmul.f32 %v1228, %v1230
    %v1232 = vadd.f32 %v1228, %v1231
    %vm1233 = vweird.f32 %v1197
    %vm1234 = vweird.f32 %v1228
    %vm1235 = vmor %vm1233, %vm1234
    %v1236 = vsel %vm1235, %v1228, %v1232
    %v1237 = vand.u32 2147483647, %v1197
    %vm1238 = vcmp.eq.f32.partialorder %v1237, 8.507059e+37
    %v1239 = vand.u32 %v1197, 2147483648
    %v1240 = vor.u32 1.1754944e-38, %v1239
    %v1241 = vsel %vm1238, %v1240, %v1236
    %v1242 = vmul.f32 1.0, %v1241
    %v1243 = vtanh.pop %v1184
    %v1244 = vmul.f32 %v1227, 0.0
    %v1245 = vmul.f32 %v1212, %v1243
    %v1246 = vadd.f32 %v1244, %v1245
    %v1247 = vtanh.pop %v1246
    %v1248 = vmul.f32 %v1242, %v1247
    %1249 = vmatpush.msra.mxu0 %v737
    %1250 = vmatpush.msra.mxu0 %v733
    %1251 = vmatpush.msra.mxu0 %v729
    %1252 = vmatpush.msra.mxu0 %v725
    %1253 = vmatpush.msra.mxu0 %v721
    %1254 = vmatpush.msra.mxu0 %v717
    %1255 = vmatpush.msra.mxu0 %v713
    %1256 = vmatpush.msra.mxu0 %v709
    %1257 = vmatpush.msra.mxu0 %v705
    %1258 = vmatpush.msra.mxu0 %v701
    %1259 = vmatpush.msra.mxu0 %v697
    %1260 = vmatpush.msra.mxu0 %v693
    %1261 = vmatpush.msra.mxu0 %v689
    %1262 = vmatpush.msra.mxu0 %v685
    %1263 = vmatpush.msra.mxu0 %v681
    %1264 = vmatpush.msra.mxu0 %v677
    %1265 = vmatmul.f32.gmra.mxu0 %v1016
    %v1266 = vpop.f32.mrf.mxu0
    %v1267 = vadd.f32 0.0, %v1266
    %1268 = vdwg.mxu0
    %1269 = vmatpush.msra.mxu0 %v738
    %1270 = vmatpush.msra.mxu0 %v734
    %1271 = vmatpush.msra.mxu0 %v730
    %1272 = vmatpush.msra.mxu0 %v726
    %1273 = vmatpush.msra.mxu0 %v722
    %1274 = vmatpush.msra.mxu0 %v718
    %1275 = vmatpush.msra.mxu0 %v714
    %1276 = vmatpush.msra.mxu0 %v710
    %1277 = vmatpush.msra.mxu0 %v706
    %1278 = vmatpush.msra.mxu0 %v702
    %1279 = vmatpush.msra.mxu0 %v698
    %1280 = vmatpush.msra.mxu0 %v694
    %1281 = vmatpush.msra.mxu0 %v690
    %1282 = vmatpush.msra.mxu0 %v686
    %1283 = vmatpush.msra.mxu0 %v682
    %1284 = vmatpush.msra.mxu0 %v678
    %1285 = vmatmul.f32.gmra.mxu0 %v1016
    %v1286 = vpop.f32.mrf.mxu0
    %v1287 = vadd.f32 0.0, %v1286
    %1288 = vdwg.mxu0
    %1289 = vmatpush.msra.mxu0 %v739
    %1290 = vmatpush.msra.mxu0 %v735
    %1291 = vmatpush.msra.mxu0 %v731
    %1292 = vmatpush.msra.mxu0 %v727
    %1293 = vmatpush.msra.mxu0 %v723
    %1294 = vmatpush.msra.mxu0 %v719
    %1295 = vmatpush.msra.mxu0 %v715
    %1296 = vmatpush.msra.mxu0 %v711
    %1297 = vmatpush.msra.mxu0 %v707
    %1298 = vmatpush.msra.mxu0 %v703
    %1299 = vmatpush.msra.mxu0 %v699
    %1300 = vmatpush.msra.mxu0 %v695
    %1301 = vmatpush.msra.mxu0 %v691
    %1302 = vmatpush.msra.mxu0 %v687
    %1303 = vmatpush.msra.mxu0 %v683
    %1304 = vmatpush.msra.mxu0 %v679
    %1305 = vmatmul.f32.gmra.mxu0 %v1016
    %v1306 = vpop.f32.mrf.mxu0
    %v1307 = vadd.f32 0.0, %v1306
    %1308 = vdwg.mxu0
    %1309 = vmatpush.msra.mxu0 %v740
    %1310 = vmatpush.msra.mxu0 %v736
    %1311 = vmatpush.msra.mxu0 %v732
    %1312 = vmatpush.msra.mxu0 %v728
    %1313 = vmatpush.msra.mxu0 %v724
    %1314 = vmatpush.msra.mxu0 %v720
    %1315 = vmatpush.msra.mxu0 %v716
    %1316 = vmatpush.msra.mxu0 %v712
    %1317 = vmatpush.msra.mxu0 %v708
    %1318 = vmatpush.msra.mxu0 %v704
    %1319 = vmatpush.msra.mxu0 %v700
    %1320 = vmatpush.msra.mxu0 %v696
    %1321 = vmatpush.msra.mxu0 %v692
    %1322 = vmatpush.msra.mxu0 %v688
    %1323 = vmatpush.msra.mxu0 %v684
    %1324 = vmatpush.msra.mxu0 %v680
    %1325 = vmatmul.f32.gmra.mxu0 %v1016
    %v1326 = vpop.f32.mrf.mxu0
    %v1327 = vadd.f32 0.0, %v1326
    %1328 = vdwg.mxu0
    %v1333 = vrot.slane %v1267, 6
    %v1334 = vrot.slane %v1287, 6
    %v1335 = vrot.slane %v1307, 6
    %v1336 = vrot.slane %v1327, 6
    %v1341 = vadd.f32 %v615, %v1333
    %v1342 = vadd.f32 %v635, %v1334
    %v1343 = vadd.f32 %v655, %v1335
    %v1344 = vadd.f32 %v675, %v1336
    %v1345 = vxor.u32 %v1341, 2147483648
    %v1346 = vxor.u32 %v1342, 2147483648
    %v1347 = vxor.u32 %v1343, 2147483648
    %v1348 = vmul.f32 %v1345, 1.442695
    %v1349 = vpow.pop %v1348
    %v1350 = vmul.f32 %v1346, 1.442695
    %v1351 = vpow.pop %v1350
    %v1352 = vmul.f32 %v1347, 1.442695
    %v1353 = vpow.pop %v1352
    %v1354 = vadd.f32 %v1349, 1.0
    %v1355 = vadd.f32 %v1351, 1.0
    %v1356 = vadd.f32 %v1353, 1.0
    %v1357 = vrcp.pop %v1354
    %v1358 = vmul.f32 %v1354, %v1357
    %v1359 = vsub.f32 1.0, %v1358
    %v1360 = vmul.f32 %v1357, %v1359
    %v1361 = vadd.f32 %v1357, %v1360
    %vm1362 = vweird.f32 %v1354
    %vm1363 = vweird.f32 %v1357
    %vm1364 = vmor %vm1362, %vm1363
    %v1365 = vsel %vm1364, %v1357, %v1361
    %v1366 = vand.u32 2147483647, %v1354
    %vm1367 = vcmp.eq.f32.partialorder %v1366, 8.507059e+37
    %v1368 = vand.u32 %v1354, 2147483648
    %v1369 = vor.u32 1.1754944e-38, %v1368
    %v1370 = vsel %vm1367, %v1369, %v1365
    %v1371 = vmul.f32 1.0, %v1370
    %v1372 = vrcp.pop %v1355
    %v1373 = vmul.f32 %v1355, %v1372
    %v1374 = vsub.f32 1.0, %v1373
    %v1375 = vmul.f32 %v1372, %v1374
    %v1376 = vadd.f32 %v1372, %v1375
    %vm1377 = vweird.f32 %v1355
    %vm1378 = vweird.f32 %v1372
    %vm1379 = vmor %vm1377, %vm1378
    %v1380 = vsel %vm1379, %v1372, %v1376
    %v1381 = vand.u32 2147483647, %v1355
    %vm1382 = vcmp.eq.f32.partialorder %v1381, 8.507059e+37
    %v1383 = vand.u32 %v1355, 2147483648
    %v1384 = vor.u32 1.1754944e-38, %v1383
    %v1385 = vsel %vm1382, %v1384, %v1380
    %v1386 = vmul.f32 1.0, %v1385
    %v1387 = vrcp.pop %v1356
    %v1388 = vmul.f32 %v1356, %v1387
    %v1389 = vsub.f32 1.0, %v1388
    %v1390 = vmul.f32 %v1387, %v1389
    %v1391 = vadd.f32 %v1387, %v1390
    %vm1392 = vweird.f32 %v1356
    %vm1393 = vweird.f32 %v1387
    %vm1394 = vmor %vm1392, %vm1393
    %v1395 = vsel %vm1394, %v1387, %v1391
    %v1396 = vand.u32 2147483647, %v1356
    %vm1397 = vcmp.eq.f32.partialorder %v1396, 8.507059e+37
    %v1398 = vand.u32 %v1356, 2147483648
    %v1399 = vor.u32 1.1754944e-38, %v1398
    %v1400 = vsel %vm1397, %v1399, %v1395
    %v1401 = vmul.f32 1.0, %v1400
    %v1402 = vtanh.pop %v1344
    %v1404 = vrot.slane %v1014, 6
    %v1406 = vmul.f32 %v1386, %v1404
    %v1407 = vmul.f32 %v1371, %v1402
    %v1408 = vadd.f32 %v1406, %v1407
    %v1409 = vtanh.pop %v1408
    %v1410 = vmul.f32 %v1401, %v1409
    %v1412 = vrot.slane %v1248, 6
    %v1414 = vrot.slane %v1410, 2
    %v1415 = vrot.slane %v1412, 2
    %1418 = vmatpush.msra.mxu0 %v801
    %1419 = vmatpush.msra.mxu0 %v797
    %1420 = vmatpush.msra.mxu0 %v793
    %1421 = vmatpush.msra.mxu0 %v789
    %1422 = vmatpush.msra.mxu0 %v785
    %1423 = vmatpush.msra.mxu0 %v781
    %1424 = vmatpush.msra.mxu0 %v777
    %1425 = vmatpush.msra.mxu0 %v773
    %1426 = vmatpush.msra.mxu0 %v769
    %1427 = vmatpush.msra.mxu0 %v765
    %1428 = vmatpush.msra.mxu0 %v761
    %1429 = vmatpush.msra.mxu0 %v757
    %1430 = vmatpush.msra.mxu0 %v753
    %1431 = vmatpush.msra.mxu0 %v749
    %1432 = vmatpush.msra.mxu0 %v745
    %1433 = vmatpush.msra.mxu0 %v741
    %1434 = vmatmul.f32.gmra.mxu0 %v1414
    %v1435 = vpop.f32.mrf.mxu0
    %v1436 = vadd.f32 %v1018, %v1435
    %1437 = vdwg.mxu0
    %1438 = vmatpush.msra.mxu0 %v865
    %1439 = vmatpush.msra.mxu0 %v861
    %1440 = vmatpush.msra.mxu0 %v857
    %1441 = vmatpush.msra.mxu0 %v853
    %1442 = vmatpush.msra.mxu0 %v849
    %1443 = vmatpush.msra.mxu0 %v845
    %1444 = vmatpush.msra.mxu0 %v841
    %1445 = vmatpush.msra.mxu0 %v837
    %1446 = vmatpush.msra.mxu0 %v833
    %1447 = vmatpush.msra.mxu0 %v829
    %1448 = vmatpush.msra.mxu0 %v825
    %1449 = vmatpush.msra.mxu0 %v821
    %1450 = vmatpush.msra.mxu0 %v817
    %1451 = vmatpush.msra.mxu0 %v813
    %1452 = vmatpush.msra.mxu0 %v809
    %1453 = vmatpush.msra.mxu0 %v805
    %1454 = vmatmul.f32.gmra.mxu0 %v1415
    %v1455 = vpop.f32.mrf.mxu0
    %v1456 = vadd.f32 %v1436, %v1455
    %1457 = vdwg.mxu0
    %1458 = vmatpush.msra.mxu0 %v802
    %1459 = vmatpush.msra.mxu0 %v798
    %1460 = vmatpush.msra.mxu0 %v794
    %1461 = vmatpush.msra.mxu0 %v790
    %1462 = vmatpush.msra.mxu0 %v786
    %1463 = vmatpush.msra.mxu0 %v782
    %1464 = vmatpush.msra.mxu0 %v778
    %1465 = vmatpush.msra.mxu0 %v774
    %1466 = vmatpush.msra.mxu0 %v770
    %1467 = vmatpush.msra.mxu0 %v766
    %1468 = vmatpush.msra.mxu0 %v762
    %1469 = vmatpush.msra.mxu0 %v758
    %1470 = vmatpush.msra.mxu0 %v754
    %1471 = vmatpush.msra.mxu0 %v750
    %1472 = vmatpush.msra.mxu0 %v746
    %1473 = vmatpush.msra.mxu0 %v742
    %1474 = vmatmul.f32.gmra.mxu0 %v1414
    %v1475 = vpop.f32.mrf.mxu0
    %v1476 = vadd.f32 %v1019, %v1475
    %1477 = vdwg.mxu0
    %1478 = vmatpush.msra.mxu0 %v866
    %1479 = vmatpush.msra.mxu0 %v862
    %1480 = vmatpush.msra.mxu0 %v858
    %1481 = vmatpush.msra.mxu0 %v854
    %1482 = vmatpush.msra.mxu0 %v850
    %1483 = vmatpush.msra.mxu0 %v846
    %1484 = vmatpush.msra.mxu0 %v842
    %1485 = vmatpush.msra.mxu0 %v838
    %1486 = vmatpush.msra.mxu0 %v834
    %1487 = vmatpush.msra.mxu0 %v830
    %1488 = vmatpush.msra.mxu0 %v826
    %1489 = vmatpush.msra.mxu0 %v822
    %1490 = vmatpush.msra.mxu0 %v818
    %1491 = vmatpush.msra.mxu0 %v814
    %1492 = vmatpush.msra.mxu0 %v810
    %1493 = vmatpush.msra.mxu0 %v806
    %1494 = vmatmul.f32.gmra.mxu0 %v1415
    %v1495 = vpop.f32.mrf.mxu0
    %v1496 = vadd.f32 %v1476, %v1495
    %1497 = vdwg.mxu0
    %1498 = vmatpush.msra.mxu0 %v803
    %1499 = vmatpush.msra.mxu0 %v799
    %1500 = vmatpush.msra.mxu0 %v795
    %1501 = vmatpush.msra.mxu0 %v791
    %1502 = vmatpush.msra.mxu0 %v787
    %1503 = vmatpush.msra.mxu0 %v783
    %1504 = vmatpush.msra.mxu0 %v779
    %1505 = vmatpush.msra.mxu0 %v775
    %1506 = vmatpush.msra.mxu0 %v771
    %1507 = vmatpush.msra.mxu0 %v767
    %1508 = vmatpush.msra.mxu0 %v763
    %1509 = vmatpush.msra.mxu0 %v759
    %1510 = vmatpush.msra.mxu0 %v755
    %1511 = vmatpush.msra.mxu0 %v751
    %1512 = vmatpush.msra.mxu0 %v747
    %1513 = vmatpush.msra.mxu0 %v743
    %1514 = vmatmul.f32.gmra.mxu0 %v1414
    %v1515 = vpop.f32.mrf.mxu0
    %v1516 = vadd.f32 %v1020, %v1515
    %1517 = vdwg.mxu0
    %1518 = vmatpush.msra.mxu0 %v867
    %1519 = vmatpush.msra.mxu0 %v863
    %1520 = vmatpush.msra.mxu0 %v859
    %1521 = vmatpush.msra.mxu0 %v855
    %1522 = vmatpush.msra.mxu0 %v851
    %1523 = vmatpush.msra.mxu0 %v847
    %1524 = vmatpush.msra.mxu0 %v843
    %1525 = vmatpush.msra.mxu0 %v839
    %1526 = vmatpush.msra.mxu0 %v835
    %1527 = vmatpush.msra.mxu0 %v831
    %1528 = vmatpush.msra.mxu0 %v827
    %1529 = vmatpush.msra.mxu0 %v823
    %1530 = vmatpush.msra.mxu0 %v819
    %1531 = vmatpush.msra.mxu0 %v815
    %1532 = vmatpush.msra.mxu0 %v811
    %1533 = vmatpush.msra.mxu0 %v807
    %1534 = vmatmul.f32.gmra.mxu0 %v1415
    %v1535 = vpop.f32.mrf.mxu0
    %v1536 = vadd.f32 %v1516, %v1535
    %1537 = vdwg.mxu0
    %1538 = vmatpush.msra.mxu0 %v804
    %1539 = vmatpush.msra.mxu0 %v800
    %1540 = vmatpush.msra.mxu0 %v796
    %1541 = vmatpush.msra.mxu0 %v792
    %1542 = vmatpush.msra.mxu0 %v788
    %1543 = vmatpush.msra.mxu0 %v784
    %1544 = vmatpush.msra.mxu0 %v780
    %1545 = vmatpush.msra.mxu0 %v776
    %1546 = vmatpush.msra.mxu0 %v772
    %1547 = vmatpush.msra.mxu0 %v768
    %1548 = vmatpush.msra.mxu0 %v764
    %1549 = vmatpush.msra.mxu0 %v760
    %1550 = vmatpush.msra.mxu0 %v756
    %1551 = vmatpush.msra.mxu0 %v752
    %1552 = vmatpush.msra.mxu0 %v748
    %1553 = vmatpush.msra.mxu0 %v744
    %1554 = vmatmul.f32.gmra.mxu0 %v1414
    %v1555 = vpop.f32.mrf.mxu0
    %v1556 = vadd.f32 %v1021, %v1555
    %1557 = vdwg.mxu0
    %1558 = vmatpush.msra.mxu0 %v868
    %1559 = vmatpush.msra.mxu0 %v864
    %1560 = vmatpush.msra.mxu0 %v860
    %1561 = vmatpush.msra.mxu0 %v856
    %1562 = vmatpush.msra.mxu0 %v852
    %1563 = vmatpush.msra.mxu0 %v848
    %1564 = vmatpush.msra.mxu0 %v844
    %1565 = vmatpush.msra.mxu0 %v840
    %1566 = vmatpush.msra.mxu0 %v836
    %1567 = vmatpush.msra.mxu0 %v832
    %1568 = vmatpush.msra.mxu0 %v828
    %1569 = vmatpush.msra.mxu0 %v824
    %1570 = vmatpush.msra.mxu0 %v820
    %1571 = vmatpush.msra.mxu0 %v816
    %1572 = vmatpush.msra.mxu0 %v812
    %1573 = vmatpush.msra.mxu0 %v808
    %1574 = vmatmul.f32.gmra.mxu0 %v1415
    %v1575 = vpop.f32.mrf.mxu0
    %v1576 = vadd.f32 %v1556, %v1575
    %1577 = vdwg.mxu0
    %v1578 = vxor.u32 %v1456, 2147483648
    %v1579 = vxor.u32 %v1496, 2147483648
    %v1580 = vxor.u32 %v1536, 2147483648
    %v1581 = vmul.f32 %v1578, 1.442695
    %v1582 = vpow.pop %v1581
    %v1583 = vmul.f32 %v1579, 1.442695
    %v1584 = vpow.pop %v1583
    %v1585 = vmul.f32 %v1580, 1.442695
    %v1586 = vpow.pop %v1585
    %v1587 = vadd.f32 %v1582, 1.0
    %v1588 = vadd.f32 %v1584, 1.0
    %v1589 = vadd.f32 %v1586, 1.0
    %v1590 = vrcp.pop %v1587
    %v1591 = vmul.f32 %v1587, %v1590
    %v1592 = vsub.f32 1.0, %v1591
    %v1593 = vmul.f32 %v1590, %v1592
    %v1594 = vadd.f32 %v1590, %v1593
    %vm1595 = vweird.f32 %v1587
    %vm1596 = vweird.f32 %v1590
    %vm1597 = vmor %vm1595, %vm1596
    %v1598 = vsel %vm1597, %v1590, %v1594
    %v1599 = vand.u32 2147483647, %v1587
    %vm1600 = vcmp.eq.f32.partialorder %v1599, 8.507059e+37
    %v1601 = vand.u32 %v1587, 2147483648
    %v1602 = vor.u32 1.1754944e-38, %v1601
    %v1603 = vsel %vm1600, %v1602, %v1598
    %v1604 = vmul.f32 1.0, %v1603
    %v1605 = vrcp.pop %v1588
    %v1606 = vmul.f32 %v1588, %v1605
    %v1607 = vsub.f32 1.0, %v1606
    %v1608 = vmul.f32 %v1605, %v1607
    %v1609 = vadd.f32 %v1605, %v1608
    %vm1610 = vweird.f32 %v1588
    %vm1611 = vweird.f32 %v1605
    %vm1612 = vmor %vm1610, %vm1611
    %v1613 = vsel %vm1612, %v1605, %v1609
    %v1614 = vand.u32 2147483647, %v1588
    %vm1615 = vcmp.eq.f32.partialorder %v1614, 8.507059e+37
    %v1616 = vand.u32 %v1588, 2147483648
    %v1617 = vor.u32 1.1754944e-38, %v1616
    %v1618 = vsel %vm1615, %v1617, %v1613
    %v1619 = vmul.f32 1.0, %v1618
    %v1620 = vrcp.pop %v1589
    %v1621 = vmul.f32 %v1589, %v1620
    %v1622 = vsub.f32 1.0, %v1621
    %v1623 = vmul.f32 %v1620, %v1622
    %v1624 = vadd.f32 %v1620, %v1623
    %vm1625 = vweird.f32 %v1589
    %vm1626 = vweird.f32 %v1620
    %vm1627 = vmor %vm1625, %vm1626
    %v1628 = vsel %vm1627, %v1620, %v1624
    %v1629 = vand.u32 2147483647, %v1589
    %vm1630 = vcmp.eq.f32.partialorder %v1629, 8.507059e+37
    %v1631 = vand.u32 %v1589, 2147483648
    %v1632 = vor.u32 1.1754944e-38, %v1631
    %v1633 = vsel %vm1630, %v1632, %v1628
    %v1634 = vmul.f32 1.0, %v1633
    %v1635 = vtanh.pop %v1576
    %v1636 = vmul.f32 %v1619, %v1246
    %v1637 = vmul.f32 %v1604, %v1635
    %v1638 = vadd.f32 %v1636, %v1637
    %v1639 = vtanh.pop %v1638
    %v1640 = vmul.f32 %v1634, %v1639
    %1641 = vmatpush.msra.mxu0 %v737
    %1642 = vmatpush.msra.mxu0 %v733
    %1643 = vmatpush.msra.mxu0 %v729
    %1644 = vmatpush.msra.mxu0 %v725
    %1645 = vmatpush.msra.mxu0 %v721
    %1646 = vmatpush.msra.mxu0 %v717
    %1647 = vmatpush.msra.mxu0 %v713
    %1648 = vmatpush.msra.mxu0 %v709
    %1649 = vmatpush.msra.mxu0 %v705
    %1650 = vmatpush.msra.mxu0 %v701
    %1651 = vmatpush.msra.mxu0 %v697
    %1652 = vmatpush.msra.mxu0 %v693
    %1653 = vmatpush.msra.mxu0 %v689
    %1654 = vmatpush.msra.mxu0 %v685
    %1655 = vmatpush.msra.mxu0 %v681
    %1656 = vmatpush.msra.mxu0 %v677
    %1657 = vmatmul.f32.gmra.mxu0 %v1414
    %v1658 = vpop.f32.mrf.mxu0
    %v1659 = vadd.f32 0.0, %v1658
    %1660 = vdwg.mxu0
    %1661 = vmatpush.msra.mxu0 %v738
    %1662 = vmatpush.msra.mxu0 %v734
    %1663 = vmatpush.msra.mxu0 %v730
    %1664 = vmatpush.msra.mxu0 %v726
    %1665 = vmatpush.msra.mxu0 %v722
    %1666 = vmatpush.msra.mxu0 %v718
    %1667 = vmatpush.msra.mxu0 %v714
    %1668 = vmatpush.msra.mxu0 %v710
    %1669 = vmatpush.msra.mxu0 %v706
    %1670 = vmatpush.msra.mxu0 %v702
    %1671 = vmatpush.msra.mxu0 %v698
    %1672 = vmatpush.msra.mxu0 %v694
    %1673 = vmatpush.msra.mxu0 %v690
    %1674 = vmatpush.msra.mxu0 %v686
    %1675 = vmatpush.msra.mxu0 %v682
    %1676 = vmatpush.msra.mxu0 %v678
    %1677 = vmatmul.f32.gmra.mxu0 %v1414
    %v1678 = vpop.f32.mrf.mxu0
    %v1679 = vadd.f32 0.0, %v1678
    %1680 = vdwg.mxu0
    %1681 = vmatpush.msra.mxu0 %v739
    %1682 = vmatpush.msra.mxu0 %v735
    %1683 = vmatpush.msra.mxu0 %v731
    %1684 = vmatpush.msra.mxu0 %v727
    %1685 = vmatpush.msra.mxu0 %v723
    %1686 = vmatpush.msra.mxu0 %v719
    %1687 = vmatpush.msra.mxu0 %v715
    %1688 = vmatpush.msra.mxu0 %v711
    %1689 = vmatpush.msra.mxu0 %v707
    %1690 = vmatpush.msra.mxu0 %v703
    %1691 = vmatpush.msra.mxu0 %v699
    %1692 = vmatpush.msra.mxu0 %v695
    %1693 = vmatpush.msra.mxu0 %v691
    %1694 = vmatpush.msra.mxu0 %v687
    %1695 = vmatpush.msra.mxu0 %v683
    %1696 = vmatpush.msra.mxu0 %v679
    %1697 = vmatmul.f32.gmra.mxu0 %v1414
    %v1698 = vpop.f32.mrf.mxu0
    %v1699 = vadd.f32 0.0, %v1698
    %1700 = vdwg.mxu0
    %1701 = vmatpush.msra.mxu0 %v740
    %1702 = vmatpush.msra.mxu0 %v736
    %1703 = vmatpush.msra.mxu0 %v732
    %1704 = vmatpush.msra.mxu0 %v728
    %1705 = vmatpush.msra.mxu0 %v724
    %1706 = vmatpush.msra.mxu0 %v720
    %1707 = vmatpush.msra.mxu0 %v716
    %1708 = vmatpush.msra.mxu0 %v712
    %1709 = vmatpush.msra.mxu0 %v708
    %1710 = vmatpush.msra.mxu0 %v704
    %1711 = vmatpush.msra.mxu0 %v700
    %1712 = vmatpush.msra.mxu0 %v696
    %1713 = vmatpush.msra.mxu0 %v692
    %1714 = vmatpush.msra.mxu0 %v688
    %1715 = vmatpush.msra.mxu0 %v684
    %1716 = vmatpush.msra.mxu0 %v680
    %1717 = vmatmul.f32.gmra.mxu0 %v1414
    %v1718 = vpop.f32.mrf.mxu0
    %v1719 = vadd.f32 0.0, %v1718
    %1720 = vdwg.mxu0
    %v1725 = vrot.slane %v1659, 4
    %v1726 = vrot.slane %v1679, 4
    %v1727 = vrot.slane %v1699, 4
    %v1728 = vrot.slane %v1719, 4
    %v1733 = vadd.f32 %v615, %v1725
    %v1734 = vadd.f32 %v635, %v1726
    %v1735 = vadd.f32 %v655, %v1727
    %v1736 = vadd.f32 %v675, %v1728
    %v1737 = vxor.u32 %v1733, 2147483648
    %v1738 = vxor.u32 %v1734, 2147483648
    %v1739 = vxor.u32 %v1735, 2147483648
    %v1740 = vmul.f32 %v1737, 1.442695
    %v1741 = vpow.pop %v1740
    %v1742 = vmul.f32 %v1738, 1.442695
    %v1743 = vpow.pop %v1742
    %v1744 = vmul.f32 %v1739, 1.442695
    %v1745 = vpow.pop %v1744
    %v1746 = vadd.f32 %v1741, 1.0
    %v1747 = vadd.f32 %v1743, 1.0
    %v1748 = vadd.f32 %v1745, 1.0
    %v1749 = vrcp.pop %v1746
    %v1750 = vmul.f32 %v1746, %v1749
    %v1751 = vsub.f32 1.0, %v1750
    %v1752 = vmul.f32 %v1749, %v1751
    %v1753 = vadd.f32 %v1749, %v1752
    %vm1754 = vweird.f32 %v1746
    %vm1755 = vweird.f32 %v1749
    %vm1756 = vmor %vm1754, %vm1755
    %v1757 = vsel %vm1756, %v1749, %v1753
    %v1758 = vand.u32 2147483647, %v1746
    %vm1759 = vcmp.eq.f32.partialorder %v1758, 8.507059e+37
    %v1760 = vand.u32 %v1746, 2147483648
    %v1761 = vor.u32 1.1754944e-38, %v1760
    %v1762 = vsel %vm1759, %v1761, %v1757
    %v1763 = vmul.f32 1.0, %v1762
    %v1764 = vrcp.pop %v1747
    %v1765 = vmul.f32 %v1747, %v1764
    %v1766 = vsub.f32 1.0, %v1765
    %v1767 = vmul.f32 %v1764, %v1766
    %v1768 = vadd.f32 %v1764, %v1767
    %vm1769 = vweird.f32 %v1747
    %vm1770 = vweird.f32 %v1764
    %vm1771 = vmor %vm1769, %vm1770
    %v1772 = vsel %vm1771, %v1764, %v1768
    %v1773 = vand.u32 2147483647, %v1747
    %vm1774 = vcmp.eq.f32.partialorder %v1773, 8.507059e+37
    %v1775 = vand.u32 %v1747, 2147483648
    %v1776 = vor.u32 1.1754944e-38, %v1775
    %v1777 = vsel %vm1774, %v1776, %v1772
    %v1778 = vmul.f32 1.0, %v1777
    %v1779 = vrcp.pop %v1748
    %v1780 = vmul.f32 %v1748, %v1779
    %v1781 = vsub.f32 1.0, %v1780
    %v1782 = vmul.f32 %v1779, %v1781
    %v1783 = vadd.f32 %v1779, %v1782
    %vm1784 = vweird.f32 %v1748
    %vm1785 = vweird.f32 %v1779
    %vm1786 = vmor %vm1784, %vm1785
    %v1787 = vsel %vm1786, %v1779, %v1783
    %v1788 = vand.u32 2147483647, %v1748
    %vm1789 = vcmp.eq.f32.partialorder %v1788, 8.507059e+37
    %v1790 = vand.u32 %v1748, 2147483648
    %v1791 = vor.u32 1.1754944e-38, %v1790
    %v1792 = vsel %vm1789, %v1791, %v1787
    %v1793 = vmul.f32 1.0, %v1792
    %v1794 = vtanh.pop %v1736
    %v1796 = vrot.slane %v1408, 6
    %v1798 = vmul.f32 %v1778, %v1796
    %v1799 = vmul.f32 %v1763, %v1794
    %v1800 = vadd.f32 %v1798, %v1799
    %v1801 = vtanh.pop %v1800
    %v1802 = vmul.f32 %v1793, %v1801
    %v1804 = vrot.slane %v1640, 4
    %v1806 = vrot.slane %v1802, 4
    %v1807 = vrot.slane %v1804, 4
    %1810 = vmatpush.msra.mxu0 %v801
    %1811 = vmatpush.msra.mxu0 %v797
    %1812 = vmatpush.msra.mxu0 %v793
    %1813 = vmatpush.msra.mxu0 %v789
    %1814 = vmatpush.msra.mxu0 %v785
    %1815 = vmatpush.msra.mxu0 %v781
    %1816 = vmatpush.msra.mxu0 %v777
    %1817 = vmatpush.msra.mxu0 %v773
    %1818 = vmatpush.msra.mxu0 %v769
    %1819 = vmatpush.msra.mxu0 %v765
    %1820 = vmatpush.msra.mxu0 %v761
    %1821 = vmatpush.msra.mxu0 %v757
    %1822 = vmatpush.msra.mxu0 %v753
    %1823 = vmatpush.msra.mxu0 %v749
    %1824 = vmatpush.msra.mxu0 %v745
    %1825 = vmatpush.msra.mxu0 %v741
    %1826 = vmatmul.f32.gmra.mxu0 %v1806
    %v1827 = vpop.f32.mrf.mxu0
    %v1828 = vadd.f32 %v1018, %v1827
    %1829 = vdwg.mxu0
    %1830 = vmatpush.msra.mxu0 %v865
    %1831 = vmatpush.msra.mxu0 %v861
    %1832 = vmatpush.msra.mxu0 %v857
    %1833 = vmatpush.msra.mxu0 %v853
    %1834 = vmatpush.msra.mxu0 %v849
    %1835 = vmatpush.msra.mxu0 %v845
    %1836 = vmatpush.msra.mxu0 %v841
    %1837 = vmatpush.msra.mxu0 %v837
    %1838 = vmatpush.msra.mxu0 %v833
    %1839 = vmatpush.msra.mxu0 %v829
    %1840 = vmatpush.msra.mxu0 %v825
    %1841 = vmatpush.msra.mxu0 %v821
    %1842 = vmatpush.msra.mxu0 %v817
    %1843 = vmatpush.msra.mxu0 %v813
    %1844 = vmatpush.msra.mxu0 %v809
    %1845 = vmatpush.msra.mxu0 %v805
    %1846 = vmatmul.f32.gmra.mxu0 %v1807
    %v1847 = vpop.f32.mrf.mxu0
    %v1848 = vadd.f32 %v1828, %v1847
    %1849 = vdwg.mxu0
    %1850 = vmatpush.msra.mxu0 %v802
    %1851 = vmatpush.msra.mxu0 %v798
    %1852 = vmatpush.msra.mxu0 %v794
    %1853 = vmatpush.msra.mxu0 %v790
    %1854 = vmatpush.msra.mxu0 %v786
    %1855 = vmatpush.msra.mxu0 %v782
    %1856 = vmatpush.msra.mxu0 %v778
    %1857 = vmatpush.msra.mxu0 %v774
    %1858 = vmatpush.msra.mxu0 %v770
    %1859 = vmatpush.msra.mxu0 %v766
    %1860 = vmatpush.msra.mxu0 %v762
    %1861 = vmatpush.msra.mxu0 %v758
    %1862 = vmatpush.msra.mxu0 %v754
    %1863 = vmatpush.msra.mxu0 %v750
    %1864 = vmatpush.msra.mxu0 %v746
    %1865 = vmatpush.msra.mxu0 %v742
    %1866 = vmatmul.f32.gmra.mxu0 %v1806
    %v1867 = vpop.f32.mrf.mxu0
    %v1868 = vadd.f32 %v1019, %v1867
    %1869 = vdwg.mxu0
    %1870 = vmatpush.msra.mxu0 %v866
    %1871 = vmatpush.msra.mxu0 %v862
    %1872 = vmatpush.msra.mxu0 %v858
    %1873 = vmatpush.msra.mxu0 %v854
    %1874 = vmatpush.msra.mxu0 %v850
    %1875 = vmatpush.msra.mxu0 %v846
    %1876 = vmatpush.msra.mxu0 %v842
    %1877 = vmatpush.msra.mxu0 %v838
    %1878 = vmatpush.msra.mxu0 %v834
    %1879 = vmatpush.msra.mxu0 %v830
    %1880 = vmatpush.msra.mxu0 %v826
    %1881 = vmatpush.msra.mxu0 %v822
    %1882 = vmatpush.msra.mxu0 %v818
    %1883 = vmatpush.msra.mxu0 %v814
    %1884 = vmatpush.msra.mxu0 %v810
    %1885 = vmatpush.msra.mxu0 %v806
    %1886 = vmatmul.f32.gmra.mxu0 %v1807
    %v1887 = vpop.f32.mrf.mxu0
    %v1888 = vadd.f32 %v1868, %v1887
    %1889 = vdwg.mxu0
    %1890 = vmatpush.msra.mxu0 %v803
    %1891 = vmatpush.msra.mxu0 %v799
    %1892 = vmatpush.msra.mxu0 %v795
    %1893 = vmatpush.msra.mxu0 %v791
    %1894 = vmatpush.msra.mxu0 %v787
    %1895 = vmatpush.msra.mxu0 %v783
    %1896 = vmatpush.msra.mxu0 %v779
    %1897 = vmatpush.msra.mxu0 %v775
    %1898 = vmatpush.msra.mxu0 %v771
    %1899 = vmatpush.msra.mxu0 %v767
    %1900 = vmatpush.msra.mxu0 %v763
    %1901 = vmatpush.msra.mxu0 %v759
    %1902 = vmatpush.msra.mxu0 %v755
    %1903 = vmatpush.msra.mxu0 %v751
    %1904 = vmatpush.msra.mxu0 %v747
    %1905 = vmatpush.msra.mxu0 %v743
    %1906 = vmatmul.f32.gmra.mxu0 %v1806
    %v1907 = vpop.f32.mrf.mxu0
    %v1908 = vadd.f32 %v1020, %v1907
    %1909 = vdwg.mxu0
    %1910 = vmatpush.msra.mxu0 %v867
    %1911 = vmatpush.msra.mxu0 %v863
    %1912 = vmatpush.msra.mxu0 %v859
    %1913 = vmatpush.msra.mxu0 %v855
    %1914 = vmatpush.msra.mxu0 %v851
    %1915 = vmatpush.msra.mxu0 %v847
    %1916 = vmatpush.msra.mxu0 %v843
    %1917 = vmatpush.msra.mxu0 %v839
    %1918 = vmatpush.msra.mxu0 %v835
    %1919 = vmatpush.msra.mxu0 %v831
    %1920 = vmatpush.msra.mxu0 %v827
    %1921 = vmatpush.msra.mxu0 %v823
    %1922 = vmatpush.msra.mxu0 %v819
    %1923 = vmatpush.msra.mxu0 %v815
    %1924 = vmatpush.msra.mxu0 %v811
    %1925 = vmatpush.msra.mxu0 %v807
    %1926 = vmatmul.f32.gmra.mxu0 %v1807
    %v1927 = vpop.f32.mrf.mxu0
    %v1928 = vadd.f32 %v1908, %v1927
    %1929 = vdwg.mxu0
    %1930 = vmatpush.msra.mxu0 %v804
    %1931 = vmatpush.msra.mxu0 %v800
    %1932 = vmatpush.msra.mxu0 %v796
    %1933 = vmatpush.msra.mxu0 %v792
    %1934 = vmatpush.msra.mxu0 %v788
    %1935 = vmatpush.msra.mxu0 %v784
    %1936 = vmatpush.msra.mxu0 %v780
    %1937 = vmatpush.msra.mxu0 %v776
    %1938 = vmatpush.msra.mxu0 %v772
    %1939 = vmatpush.msra.mxu0 %v768
    %1940 = vmatpush.msra.mxu0 %v764
    %1941 = vmatpush.msra.mxu0 %v760
    %1942 = vmatpush.msra.mxu0 %v756
    %1943 = vmatpush.msra.mxu0 %v752
    %1944 = vmatpush.msra.mxu0 %v748
    %1945 = vmatpush.msra.mxu0 %v744
    %1946 = vmatmul.f32.gmra.mxu0 %v1806
    %v1947 = vpop.f32.mrf.mxu0
    %v1948 = vadd.f32 %v1021, %v1947
    %1949 = vdwg.mxu0
    %1950 = vmatpush.msra.mxu0 %v868
    %1951 = vmatpush.msra.mxu0 %v864
    %1952 = vmatpush.msra.mxu0 %v860
    %1953 = vmatpush.msra.mxu0 %v856
    %1954 = vmatpush.msra.mxu0 %v852
    %1955 = vmatpush.msra.mxu0 %v848
    %1956 = vmatpush.msra.mxu0 %v844
    %1957 = vmatpush.msra.mxu0 %v840
    %1958 = vmatpush.msra.mxu0 %v836
    %1959 = vmatpush.msra.mxu0 %v832
    %1960 = vmatpush.msra.mxu0 %v828
    %1961 = vmatpush.msra.mxu0 %v824
    %1962 = vmatpush.msra.mxu0 %v820
    %1963 = vmatpush.msra.mxu0 %v816
    %1964 = vmatpush.msra.mxu0 %v812
    %1965 = vmatpush.msra.mxu0 %v808
    %1966 = vmatmul.f32.gmra.mxu0 %v1807
    %v1967 = vpop.f32.mrf.mxu0
    %v1968 = vadd.f32 %v1948, %v1967
    %1969 = vdwg.mxu0
    %v1970 = vxor.u32 %v1848, 2147483648
    %v1971 = vxor.u32 %v1888, 2147483648
    %v1972 = vxor.u32 %v1928, 2147483648
    %v1973 = vmul.f32 %v1970, 1.442695
    %v1974 = vpow.pop %v1973
    %v1975 = vmul.f32 %v1971, 1.442695
    %v1976 = vpow.pop %v1975
    %v1977 = vmul.f32 %v1972, 1.442695
    %v1978 = vpow.pop %v1977
    %v1979 = vadd.f32 %v1974, 1.0
    %v1980 = vadd.f32 %v1976, 1.0
    %v1981 = vadd.f32 %v1978, 1.0
    %v1982 = vrcp.pop %v1979
    %v1983 = vmul.f32 %v1979, %v1982
    %v1984 = vsub.f32 1.0, %v1983
    %v1985 = vmul.f32 %v1982, %v1984
    %v1986 = vadd.f32 %v1982, %v1985
    %vm1987 = vweird.f32 %v1979
    %vm1988 = vweird.f32 %v1982
    %vm1989 = vmor %vm1987, %vm1988
    %v1990 = vsel %vm1989, %v1982, %v1986
    %v1991 = vand.u32 2147483647, %v1979
    %vm1992 = vcmp.eq.f32.partialorder %v1991, 8.507059e+37
    %v1993 = vand.u32 %v1979, 2147483648
    %v1994 = vor.u32 1.1754944e-38, %v1993
    %v1995 = vsel %vm1992, %v1994, %v1990
    %v1996 = vmul.f32 1.0, %v1995
    %v1997 = vrcp.pop %v1980
    %v1998 = vmul.f32 %v1980, %v1997
    %v1999 = vsub.f32 1.0, %v1998
    %v2000 = vmul.f32 %v1997, %v1999
    %v2001 = vadd.f32 %v1997, %v2000
    %vm2002 = vweird.f32 %v1980
    %vm2003 = vweird.f32 %v1997
    %vm2004 = vmor %vm2002, %vm2003
    %v2005 = vsel %vm2004, %v1997, %v2001
    %v2006 = vand.u32 2147483647, %v1980
    %vm2007 = vcmp.eq.f32.partialorder %v2006, 8.507059e+37
    %v2008 = vand.u32 %v1980, 2147483648
    %v2009 = vor.u32 1.1754944e-38, %v2008
    %v2010 = vsel %vm2007, %v2009, %v2005
    %v2011 = vmul.f32 1.0, %v2010
    %v2012 = vrcp.pop %v1981
    %v2013 = vmul.f32 %v1981, %v2012
    %v2014 = vsub.f32 1.0, %v2013
    %v2015 = vmul.f32 %v2012, %v2014
    %v2016 = vadd.f32 %v2012, %v2015
    %vm2017 = vweird.f32 %v1981
    %vm2018 = vweird.f32 %v2012
    %vm2019 = vmor %vm2017, %vm2018
    %v2020 = vsel %vm2019, %v2012, %v2016
    %v2021 = vand.u32 2147483647, %v1981
    %vm2022 = vcmp.eq.f32.partialorder %v2021, 8.507059e+37
    %v2023 = vand.u32 %v1981, 2147483648
    %v2024 = vor.u32 1.1754944e-38, %v2023
    %v2025 = vsel %vm2022, %v2024, %v2020
    %v2026 = vmul.f32 1.0, %v2025
    %v2027 = vtanh.pop %v1968
    %v2028 = vmul.f32 %v2011, %v1638
    %v2029 = vmul.f32 %v1996, %v2027
    %v2030 = vadd.f32 %v2028, %v2029
    %v2031 = vtanh.pop %v2030
    %v2032 = vmul.f32 %v2026, %v2031
    %2033 = vmatpush.msra.mxu0 %v737
    %2034 = vmatpush.msra.mxu0 %v733
    %2035 = vmatpush.msra.mxu0 %v729
    %2036 = vmatpush.msra.mxu0 %v725
    %2037 = vmatpush.msra.mxu0 %v721
    %2038 = vmatpush.msra.mxu0 %v717
    %2039 = vmatpush.msra.mxu0 %v713
    %2040 = vmatpush.msra.mxu0 %v709
    %2041 = vmatpush.msra.mxu0 %v705
    %2042 = vmatpush.msra.mxu0 %v701
    %2043 = vmatpush.msra.mxu0 %v697
    %2044 = vmatpush.msra.mxu0 %v693
    %2045 = vmatpush.msra.mxu0 %v689
    %2046 = vmatpush.msra.mxu0 %v685
    %2047 = vmatpush.msra.mxu0 %v681
    %2048 = vmatpush.msra.mxu0 %v677
    %2049 = vmatmul.f32.gmra.mxu0 %v1806
    %v2050 = vpop.f32.mrf.mxu0
    %v2051 = vadd.f32 0.0, %v2050
    %2052 = vdwg.mxu0
    %2053 = vmatpush.msra.mxu0 %v738
    %2054 = vmatpush.msra.mxu0 %v734
    %2055 = vmatpush.msra.mxu0 %v730
    %2056 = vmatpush.msra.mxu0 %v726
    %2057 = vmatpush.msra.mxu0 %v722
    %2058 = vmatpush.msra.mxu0 %v718
    %2059 = vmatpush.msra.mxu0 %v714
    %2060 = vmatpush.msra.mxu0 %v710
    %2061 = vmatpush.msra.mxu0 %v706
    %2062 = vmatpush.msra.mxu0 %v702
    %2063 = vmatpush.msra.mxu0 %v698
    %2064 = vmatpush.msra.mxu0 %v694
    %2065 = vmatpush.msra.mxu0 %v690
    %2066 = vmatpush.msra.mxu0 %v686
    %2067 = vmatpush.msra.mxu0 %v682
    %2068 = vmatpush.msra.mxu0 %v678
    %2069 = vmatmul.f32.gmra.mxu0 %v1806
    %v2070 = vpop.f32.mrf.mxu0
    %v2071 = vadd.f32 0.0, %v2070
    %2072 = vdwg.mxu0
    %2073 = vmatpush.msra.mxu0 %v739
    %2074 = vmatpush.msra.mxu0 %v735
    %2075 = vmatpush.msra.mxu0 %v731
    %2076 = vmatpush.msra.mxu0 %v727
    %2077 = vmatpush.msra.mxu0 %v723
    %2078 = vmatpush.msra.mxu0 %v719
    %2079 = vmatpush.msra.mxu0 %v715
    %2080 = vmatpush.msra.mxu0 %v711
    %2081 = vmatpush.msra.mxu0 %v707
    %2082 = vmatpush.msra.mxu0 %v703
    %2083 = vmatpush.msra.mxu0 %v699
    %2084 = vmatpush.msra.mxu0 %v695
    %2085 = vmatpush.msra.mxu0 %v691
    %2086 = vmatpush.msra.mxu0 %v687
    %2087 = vmatpush.msra.mxu0 %v683
    %2088 = vmatpush.msra.mxu0 %v679
    %2089 = vmatmul.f32.gmra.mxu0 %v1806
    %v2090 = vpop.f32.mrf.mxu0
    %v2091 = vadd.f32 0.0, %v2090
    %2092 = vdwg.mxu0
    %2093 = vmatpush.msra.mxu0 %v740
    %2094 = vmatpush.msra.mxu0 %v736
    %2095 = vmatpush.msra.mxu0 %v732
    %2096 = vmatpush.msra.mxu0 %v728
    %2097 = vmatpush.msra.mxu0 %v724
    %2098 = vmatpush.msra.mxu0 %v720
    %2099 = vmatpush.msra.mxu0 %v716
    %2100 = vmatpush.msra.mxu0 %v712
    %2101 = vmatpush.msra.mxu0 %v708
    %2102 = vmatpush.msra.mxu0 %v704
    %2103 = vmatpush.msra.mxu0 %v700
    %2104 = vmatpush.msra.mxu0 %v696
    %2105 = vmatpush.msra.mxu0 %v692
    %2106 = vmatpush.msra.mxu0 %v688
    %2107 = vmatpush.msra.mxu0 %v684
    %2108 = vmatpush.msra.mxu0 %v680
    %2109 = vmatmul.f32.gmra.mxu0 %v1806
    %v2110 = vpop.f32.mrf.mxu0
    %v2111 = vadd.f32 0.0, %v2110
    %2112 = vdwg.mxu0
    %v2117 = vrot.slane %v2051, 2
    %v2118 = vrot.slane %v2071, 2
    %v2119 = vrot.slane %v2091, 2
    %v2120 = vrot.slane %v2111, 2
    %v2125 = vadd.f32 %v615, %v2117
    %v2126 = vadd.f32 %v635, %v2118
    %v2127 = vadd.f32 %v655, %v2119
    %v2128 = vadd.f32 %v675, %v2120
    %v2129 = vxor.u32 %v2125, 2147483648
    %v2130 = vxor.u32 %v2126, 2147483648
    %v2131 = vxor.u32 %v2127, 2147483648
    %v2132 = vmul.f32 %v2129, 1.442695
    %v2133 = vpow.pop %v2132
    %v2134 = vmul.f32 %v2130, 1.442695
    %v2135 = vpow.pop %v2134
    %v2136 = vmul.f32 %v2131, 1.442695
    %v2137 = vpow.pop %v2136
    %v2138 = vadd.f32 %v2133, 1.0
    %v2139 = vadd.f32 %v2135, 1.0
    %v2140 = vadd.f32 %v2137, 1.0
    %v2141 = vrcp.pop %v2138
    %v2142 = vmul.f32 %v2138, %v2141
    %v2143 = vsub.f32 1.0, %v2142
    %v2144 = vmul.f32 %v2141, %v2143
    %v2145 = vadd.f32 %v2141, %v2144
    %vm2146 = vweird.f32 %v2138
    %vm2147 = vweird.f32 %v2141
    %vm2148 = vmor %vm2146, %vm2147
    %v2149 = vsel %vm2148, %v2141, %v2145
    %v2150 = vand.u32 2147483647, %v2138
    %vm2151 = vcmp.eq.f32.partialorder %v2150, 8.507059e+37
    %v2152 = vand.u32 %v2138, 2147483648
    %v2153 = vor.u32 1.1754944e-38, %v2152
    %v2154 = vsel %vm2151, %v2153, %v2149
    %v2155 = vmul.f32 1.0, %v2154
    %v2156 = vrcp.pop %v2139
    %v2157 = vmul.f32 %v2139, %v2156
    %v2158 = vsub.f32 1.0, %v2157
    %v2159 = vmul.f32 %v2156, %v2158
    %v2160 = vadd.f32 %v2156, %v2159
    %vm2161 = vweird.f32 %v2139
    %vm2162 = vweird.f32 %v2156
    %vm2163 = vmor %vm2161, %vm2162
    %v2164 = vsel %vm2163, %v2156, %v2160
    %v2165 = vand.u32 2147483647, %v2139
    %vm2166 = vcmp.eq.f32.partialorder %v2165, 8.507059e+37
    %v2167 = vand.u32 %v2139, 2147483648
    %v2168 = vor.u32 1.1754944e-38, %v2167
    %v2169 = vsel %vm2166, %v2168, %v2164
    %v2170 = vmul.f32 1.0, %v2169
    %v2171 = vrcp.pop %v2140
    %v2172 = vmul.f32 %v2140, %v2171
    %v2173 = vsub.f32 1.0, %v2172
    %v2174 = vmul.f32 %v2171, %v2173
    %v2175 = vadd.f32 %v2171, %v2174
    %vm2176 = vweird.f32 %v2140
    %vm2177 = vweird.f32 %v2171
    %vm2178 = vmor %vm2176, %vm2177
    %v2179 = vsel %vm2178, %v2171, %v2175
    %v2180 = vand.u32 2147483647, %v2140
    %vm2181 = vcmp.eq.f32.partialorder %v2180, 8.507059e+37
    %v2182 = vand.u32 %v2140, 2147483648
    %v2183 = vor.u32 1.1754944e-38, %v2182
    %v2184 = vsel %vm2181, %v2183, %v2179
    %v2185 = vmul.f32 1.0, %v2184
    %v2186 = vtanh.pop %v2128
    %v2188 = vrot.slane %v1800, 6
    %v2190 = vmul.f32 %v2170, %v2188
    %v2191 = vmul.f32 %v2155, %v2186
    %v2192 = vadd.f32 %v2190, %v2191
    %v2193 = vtanh.pop %v2192
    %v2194 = vmul.f32 %v2185, %v2193
    %v2196 = vrot.slane %v2032, 2
    %v2198 = vrot.slane %v2194, 6
    %v2199 = vrot.slane %v2196, 6
    %2202 = vmatpush.msra.mxu0 %v801
    %2203 = vmatpush.msra.mxu0 %v797
    %2204 = vmatpush.msra.mxu0 %v793
    %2205 = vmatpush.msra.mxu0 %v789
    %2206 = vmatpush.msra.mxu0 %v785
    %2207 = vmatpush.msra.mxu0 %v781
    %2208 = vmatpush.msra.mxu0 %v777
    %2209 = vmatpush.msra.mxu0 %v773
    %2210 = vmatpush.msra.mxu0 %v769
    %2211 = vmatpush.msra.mxu0 %v765
    %2212 = vmatpush.msra.mxu0 %v761
    %2213 = vmatpush.msra.mxu0 %v757
    %2214 = vmatpush.msra.mxu0 %v753
    %2215 = vmatpush.msra.mxu0 %v749
    %2216 = vmatpush.msra.mxu0 %v745
    %2217 = vmatpush.msra.mxu0 %v741
    %2218 = vmatmul.f32.gmra.mxu0 %v2198
    %v2219 = vpop.f32.mrf.mxu0
    %v2220 = vadd.f32 %v1018, %v2219
    %2221 = vdwg.mxu0
    %2222 = vmatpush.msra.mxu0 %v865
    %2223 = vmatpush.msra.mxu0 %v861
    %2224 = vmatpush.msra.mxu0 %v857
    %2225 = vmatpush.msra.mxu0 %v853
    %2226 = vmatpush.msra.mxu0 %v849
    %2227 = vmatpush.msra.mxu0 %v845
    %2228 = vmatpush.msra.mxu0 %v841
    %2229 = vmatpush.msra.mxu0 %v837
    %2230 = vmatpush.msra.mxu0 %v833
    %2231 = vmatpush.msra.mxu0 %v829
    %2232 = vmatpush.msra.mxu0 %v825
    %2233 = vmatpush.msra.mxu0 %v821
    %2234 = vmatpush.msra.mxu0 %v817
    %2235 = vmatpush.msra.mxu0 %v813
    %2236 = vmatpush.msra.mxu0 %v809
    %2237 = vmatpush.msra.mxu0 %v805
    %2238 = vmatmul.f32.gmra.mxu0 %v2199
    %v2239 = vpop.f32.mrf.mxu0
    %v2240 = vadd.f32 %v2220, %v2239
    %2241 = vdwg.mxu0
    %2242 = vmatpush.msra.mxu0 %v802
    %2243 = vmatpush.msra.mxu0 %v798
    %2244 = vmatpush.msra.mxu0 %v794
    %2245 = vmatpush.msra.mxu0 %v790
    %2246 = vmatpush.msra.mxu0 %v786
    %2247 = vmatpush.msra.mxu0 %v782
    %2248 = vmatpush.msra.mxu0 %v778
    %2249 = vmatpush.msra.mxu0 %v774
    %2250 = vmatpush.msra.mxu0 %v770
    %2251 = vmatpush.msra.mxu0 %v766
    %2252 = vmatpush.msra.mxu0 %v762
    %2253 = vmatpush.msra.mxu0 %v758
    %2254 = vmatpush.msra.mxu0 %v754
    %2255 = vmatpush.msra.mxu0 %v750
    %2256 = vmatpush.msra.mxu0 %v746
    %2257 = vmatpush.msra.mxu0 %v742
    %2258 = vmatmul.f32.gmra.mxu0 %v2198
    %v2259 = vpop.f32.mrf.mxu0
    %v2260 = vadd.f32 %v1019, %v2259
    %2261 = vdwg.mxu0
    %2262 = vmatpush.msra.mxu0 %v866
    %2263 = vmatpush.msra.mxu0 %v862
    %2264 = vmatpush.msra.mxu0 %v858
    %2265 = vmatpush.msra.mxu0 %v854
    %2266 = vmatpush.msra.mxu0 %v850
    %2267 = vmatpush.msra.mxu0 %v846
    %2268 = vmatpush.msra.mxu0 %v842
    %2269 = vmatpush.msra.mxu0 %v838
    %2270 = vmatpush.msra.mxu0 %v834
    %2271 = vmatpush.msra.mxu0 %v830
    %2272 = vmatpush.msra.mxu0 %v826
    %2273 = vmatpush.msra.mxu0 %v822
    %2274 = vmatpush.msra.mxu0 %v818
    %2275 = vmatpush.msra.mxu0 %v814
    %2276 = vmatpush.msra.mxu0 %v810
    %2277 = vmatpush.msra.mxu0 %v806
    %2278 = vmatmul.f32.gmra.mxu0 %v2199
    %v2279 = vpop.f32.mrf.mxu0
    %v2280 = vadd.f32 %v2260, %v2279
    %2281 = vdwg.mxu0
    %2282 = vmatpush.msra.mxu0 %v803
    %2283 = vmatpush.msra.mxu0 %v799
    %2284 = vmatpush.msra.mxu0 %v795
    %2285 = vmatpush.msra.mxu0 %v791
    %2286 = vmatpush.msra.mxu0 %v787
    %2287 = vmatpush.msra.mxu0 %v783
    %2288 = vmatpush.msra.mxu0 %v779
    %2289 = vmatpush.msra.mxu0 %v775
    %2290 = vmatpush.msra.mxu0 %v771
    %2291 = vmatpush.msra.mxu0 %v767
    %2292 = vmatpush.msra.mxu0 %v763
    %2293 = vmatpush.msra.mxu0 %v759
    %2294 = vmatpush.msra.mxu0 %v755
    %2295 = vmatpush.msra.mxu0 %v751
    %2296 = vmatpush.msra.mxu0 %v747
    %2297 = vmatpush.msra.mxu0 %v743
    %2298 = vmatmul.f32.gmra.mxu0 %v2198
    %v2299 = vpop.f32.mrf.mxu0
    %v2300 = vadd.f32 %v1020, %v2299
    %2301 = vdwg.mxu0
    %2302 = vmatpush.msra.mxu0 %v867
    %2303 = vmatpush.msra.mxu0 %v863
    %2304 = vmatpush.msra.mxu0 %v859
    %2305 = vmatpush.msra.mxu0 %v855
    %2306 = vmatpush.msra.mxu0 %v851
    %2307 = vmatpush.msra.mxu0 %v847
    %2308 = vmatpush.msra.mxu0 %v843
    %2309 = vmatpush.msra.mxu0 %v839
    %2310 = vmatpush.msra.mxu0 %v835
    %2311 = vmatpush.msra.mxu0 %v831
    %2312 = vmatpush.msra.mxu0 %v827
    %2313 = vmatpush.msra.mxu0 %v823
    %2314 = vmatpush.msra.mxu0 %v819
    %2315 = vmatpush.msra.mxu0 %v815
    %2316 = vmatpush.msra.mxu0 %v811
    %2317 = vmatpush.msra.mxu0 %v807
    %2318 = vmatmul.f32.gmra.mxu0 %v2199
    %v2319 = vpop.f32.mrf.mxu0
    %v2320 = vadd.f32 %v2300, %v2319
    %2321 = vdwg.mxu0
    %2322 = vmatpush.msra.mxu0 %v804
    %2323 = vmatpush.msra.mxu0 %v800
    %2324 = vmatpush.msra.mxu0 %v796
    %2325 = vmatpush.msra.mxu0 %v792
    %2326 = vmatpush.msra.mxu0 %v788
    %2327 = vmatpush.msra.mxu0 %v784
    %2328 = vmatpush.msra.mxu0 %v780
    %2329 = vmatpush.msra.mxu0 %v776
    %2330 = vmatpush.msra.mxu0 %v772
    %2331 = vmatpush.msra.mxu0 %v768
    %2332 = vmatpush.msra.mxu0 %v764
    %2333 = vmatpush.msra.mxu0 %v760
    %2334 = vmatpush.msra.mxu0 %v756
    %2335 = vmatpush.msra.mxu0 %v752
    %2336 = vmatpush.msra.mxu0 %v748
    %2337 = vmatpush.msra.mxu0 %v744
    %2338 = vmatmul.f32.gmra.mxu0 %v2198
    %v2339 = vpop.f32.mrf.mxu0
    %v2340 = vadd.f32 %v1021, %v2339
    %2341 = vdwg.mxu0
    %2342 = vmatpush.msra.mxu0 %v868
    %2343 = vmatpush.msra.mxu0 %v864
    %2344 = vmatpush.msra.mxu0 %v860
    %2345 = vmatpush.msra.mxu0 %v856
    %2346 = vmatpush.msra.mxu0 %v852
    %2347 = vmatpush.msra.mxu0 %v848
    %2348 = vmatpush.msra.mxu0 %v844
    %2349 = vmatpush.msra.mxu0 %v840
    %2350 = vmatpush.msra.mxu0 %v836
    %2351 = vmatpush.msra.mxu0 %v832
    %2352 = vmatpush.msra.mxu0 %v828
    %2353 = vmatpush.msra.mxu0 %v824
    %2354 = vmatpush.msra.mxu0 %v820
    %2355 = vmatpush.msra.mxu0 %v816
    %2356 = vmatpush.msra.mxu0 %v812
    %2357 = vmatpush.msra.mxu0 %v808
    %2358 = vmatmul.f32.gmra.mxu0 %v2199
    %v2359 = vpop.f32.mrf.mxu0
    %v2360 = vadd.f32 %v2340, %v2359
    %2361 = vdwg.mxu0
    %v2362 = vxor.u32 %v2240, 2147483648
    %v2363 = vxor.u32 %v2280, 2147483648
    %v2364 = vxor.u32 %v2320, 2147483648
    %v2365 = vmul.f32 %v2362, 1.442695
    %v2366 = vpow.pop %v2365
    %v2367 = vmul.f32 %v2363, 1.442695
    %v2368 = vpow.pop %v2367
    %v2369 = vmul.f32 %v2364, 1.442695
    %v2370 = vpow.pop %v2369
    %v2371 = vadd.f32 %v2366, 1.0
    %v2372 = vadd.f32 %v2368, 1.0
    %v2373 = vadd.f32 %v2370, 1.0
    %v2374 = vrcp.pop %v2371
    %v2375 = vmul.f32 %v2371, %v2374
    %v2376 = vsub.f32 1.0, %v2375
    %v2377 = vmul.f32 %v2374, %v2376
    %v2378 = vadd.f32 %v2374, %v2377
    %vm2379 = vweird.f32 %v2371
    %vm2380 = vweird.f32 %v2374
    %vm2381 = vmor %vm2379, %vm2380
    %v2382 = vsel %vm2381, %v2374, %v2378
    %v2383 = vand.u32 2147483647, %v2371
    %vm2384 = vcmp.eq.f32.partialorder %v2383, 8.507059e+37
    %v2385 = vand.u32 %v2371, 2147483648
    %v2386 = vor.u32 1.1754944e-38, %v2385
    %v2387 = vsel %vm2384, %v2386, %v2382
    %v2388 = vmul.f32 1.0, %v2387
    %v2389 = vrcp.pop %v2372
    %v2390 = vmul.f32 %v2372, %v2389
    %v2391 = vsub.f32 1.0, %v2390
    %v2392 = vmul.f32 %v2389, %v2391
    %v2393 = vadd.f32 %v2389, %v2392
    %vm2394 = vweird.f32 %v2372
    %vm2395 = vweird.f32 %v2389
    %vm2396 = vmor %vm2394, %vm2395
    %v2397 = vsel %vm2396, %v2389, %v2393
    %v2398 = vand.u32 2147483647, %v2372
    %vm2399 = vcmp.eq.f32.partialorder %v2398, 8.507059e+37
    %v2400 = vand.u32 %v2372, 2147483648
    %v2401 = vor.u32 1.1754944e-38, %v2400
    %v2402 = vsel %vm2399, %v2401, %v2397
    %v2403 = vmul.f32 1.0, %v2402
    %v2404 = vrcp.pop %v2373
    %v2405 = vmul.f32 %v2373, %v2404
    %v2406 = vsub.f32 1.0, %v2405
    %v2407 = vmul.f32 %v2404, %v2406
    %v2408 = vadd.f32 %v2404, %v2407
    %vm2409 = vweird.f32 %v2373
    %vm2410 = vweird.f32 %v2404
    %vm2411 = vmor %vm2409, %vm2410
    %v2412 = vsel %vm2411, %v2404, %v2408
    %v2413 = vand.u32 2147483647, %v2373
    %vm2414 = vcmp.eq.f32.partialorder %v2413, 8.507059e+37
    %v2415 = vand.u32 %v2373, 2147483648
    %v2416 = vor.u32 1.1754944e-38, %v2415
    %v2417 = vsel %vm2414, %v2416, %v2412
    %v2418 = vmul.f32 1.0, %v2417
    %v2419 = vtanh.pop %v2360
    %v2420 = vmul.f32 %v2403, %v2030
    %v2421 = vmul.f32 %v2388, %v2419
    %v2422 = vadd.f32 %v2420, %v2421
    %v2423 = vtanh.pop %v2422
    %v2424 = vmul.f32 %v2418, %v2423
    %v2425 = vld [vmem:[%s16] sm:$0x1]
    %v2427 = vperm.slane %v2425, 0
    %v2429 = vmul.f32 %v2424, %v2427
    %v2430 = vld [vmem:[%s17] sm:$0x1]
    %v2432 = vperm.slane %v2430, 0
    %v2434 = vadd.f32 %v2429, %v2432
    %v2435 = vmax.f32 %v2434, 0.0
    %v2436 = vld [vmem:[%s18] sm:$0xff]
    %v2437 = vld [vmem:[%s18 + $0x8] sm:$0xff]
    %v2438 = vld [vmem:[%s18 + $0x10] sm:$0xff]
    %v2439 = vld [vmem:[%s18 + $0x18] sm:$0xff]
    %v2440 = vld [vmem:[%s18 + $0x20] sm:$0xff]
    %v2441 = vld [vmem:[%s18 + $0x28] sm:$0xff]
    %v2442 = vld [vmem:[%s18 + $0x30] sm:$0xff]
    %v2443 = vld [vmem:[%s18 + $0x38] sm:$0xff]
    %v2444 = vld [vmem:[%s18 + $0x40] sm:$0xff]
    %v2445 = vld [vmem:[%s18 + $0x48] sm:$0xff]
    %v2446 = vld [vmem:[%s18 + $0x50] sm:$0xff]
    %v2447 = vld [vmem:[%s18 + $0x58] sm:$0xff]
    %v2448 = vld [vmem:[%s18 + $0x60] sm:$0xff]
    %v2449 = vld [vmem:[%s18 + $0x68] sm:$0xff]
    %v2450 = vld [vmem:[%s18 + $0x70] sm:$0xff]
    %v2451 = vld [vmem:[%s18 + $0x78] sm:$0xff]
    %v2452 = vld [vmem:[%s19] sm:$0x1]
    %v2454 = vperm.slane %v2452, 0
    %2456 = vmatpush.msra.mxu0 %v2451
    %2457 = vmatpush.msra.mxu0 %v2450
    %2458 = vmatpush.msra.mxu0 %v2449
    %2459 = vmatpush.msra.mxu0 %v2448
    %2460 = vmatpush.msra.mxu0 %v2447
    %2461 = vmatpush.msra.mxu0 %v2446
    %2462 = vmatpush.msra.mxu0 %v2445
    %2463 = vmatpush.msra.mxu0 %v2444
    %2464 = vmatpush.msra.mxu0 %v2443
    %2465 = vmatpush.msra.mxu0 %v2442
    %2466 = vmatpush.msra.mxu0 %v2441
    %2467 = vmatpush.msra.mxu0 %v2440
    %2468 = vmatpush.msra.mxu0 %v2439
    %2469 = vmatpush.msra.mxu0 %v2438
    %2470 = vmatpush.msra.mxu0 %v2437
    %2471 = vmatpush.msra.mxu0 %v2436
    %2472 = vmatmul.f32.gmra.mxu0 %v2435
    %v2473 = vpop.f32.mrf.mxu0
    %v2474 = vadd.f32 %v2454, %v2473
    %2475 = vdwg.mxu0
    %vm2476 = vcmask 132096
    %2477 = vst.msk [vmem:[#allocation2] sm:$0x3] %vm2476, %v2474
    // Predicated region
    $region82: #{forward_pallas.1} parent=1 // pred_check
      _
    $region83: #{forward_pallas.1} parent=1 // pred_check_branch
      %2479 = sbr.rel (0) target = $region85
    $region84: #{forward_pallas.1} parent=1 // pred_region
      %2481 = vsyncadd [#allocation3], 0
      %s2483 = sshll.u32 [#allocation2], 4
      %s2484 = int_to_ptr.vmem [resolvable:$true] %s2483
      %s2485 = sshll.u32 %s20, 4
      %s2486 = int_to_ptr.hbm [resolvable:$true] %s2485
      %2488 = dma.vmem_to_hbm [thread:$0]  %s2484, 32, %s2486, [#allocation3]
    $region85: #{forward_pallas.1} parent=1 // pred_fallthru
      _
    // Predicated region
    $region86: #{forward_pallas.1} parent=1 // pred_check
      _
    $region87: #{forward_pallas.1} parent=1 // pred_check_branch
      %2490 = sbr.rel (0) target = $region89
    $region88: #{forward_pallas.1} parent=1 // pred_region
      %2492 = dma.done [#allocation3], 32
    $region89: #{forward_pallas.1} parent=1 // pred_fallthru
      _
    %2493 = vsyncpa [#allocation3], 1

</llo_original>
